<compile_context>
chip_gen: v7x
topology: tpu7x:2x2x1
jax: 0.10.0
libtpu: 0.0.40
codegen_flags: <defaults>
</compile_context>

<pallas_src>
import math
import jax
import jax.numpy as jnp
from jax.experimental import pallas as pl
from jax.experimental.pallas import tpu as pltpu


_VMEM_LIMIT_BYTES = 32 * 1024 * 1024   # explicit budget: <= v7x's 64 MiB physical VMEM
_PER_TAP_MIN_C = 128                    # per-tap accumulating dots once K=C fills the MXU


# ----------------------------------------------------------------------------
# Pallas kernel 1: feature extractor (3x3 conv, stride 1, pad 1), NCHW in / NCHW out.
# One image per grid step.  Small C: the 9 taps are concatenated along K and the whole
# conv is a single (Cout, 9*Cin) x (9*Cin, H*W) MXU matmul.  C >= 128: per-tap
# accumulating dots instead (no im2col materialization).  Stores are lane-dense
# (Cout, H*W) blocks.
# ----------------------------------------------------------------------------
def conv3x3(x_nchw, w_oihw, b, *, compute_dtype=jnp.bfloat16):
    """x: (N, Cin, H, W); w: (Cout, Cin, 3, 3); b: (Cout,)  ->  (N, Cout, H, W) float32."""
    N, Cin, H, W = x_nchw.shape
    Cout = w_oihw.shape[0]
    Hp, Wp = H + 2, W + 2
    per_tap = Cin >= _PER_TAP_MIN_C

    # bf16 features/weights halve HBM+VMEM traffic and double MXU rate on v6e/v7x;
    # accumulation and bias epilogue stay f32 (works on v5e too).
    xp = jnp.pad(x_nchw.astype(compute_dtype), ((0, 0), (0, 0), (1, 1), (1, 1)))
    # (Cout, Cin, 3, 3) -> (Cout, kh, kw, ci) -> (Cout, 9*Cin); column order (kh, kw, ci)
    # matches the per-tap / im2col row order inside the kernel.
    w2 = jnp.transpose(w_oihw, (0, 2, 3, 1)).reshape(Cout, 9 * Cin).astype(compute_dtype)
    b2 = b.reshape(Cout, 1).astype(jnp.float32)

    def kernel(x_ref, w_ref, b_ref, o_ref):
        def tap(kh, kw):
            # slice the Ref directly: no full padded-block load into vregs first
            return x_ref[0, :, kh:kh + H, kw:kw + W].reshape(Cin, H * W)

        if per_tap:
            # production-C path: 9 accumulating MXU dots, K = Cin each
            acc = jnp.zeros((Cout, H * W), jnp.float32)
            for t in range(9):
                kh, kw = divmod(t, 3)
                acc = acc + jnp.dot(w_ref[:, t * Cin:(t + 1) * Cin], tap(kh, kw),
                                    preferred_element_type=jnp.float32)
        else:
            # tiny-C path: concatenate taps along K so a single dot fills the MXU
            im2col = jnp.concatenate(
                [tap(kh, kw) for kh in range(3) for kw in range(3)], axis=0)
            acc = jnp.dot(w_ref[...], im2col, preferred_element_type=jnp.float32)
        acc = acc + b_ref[...]                                  # f32 epilogue
        o_ref[...] = acc[None].astype(o_ref.dtype)              # (1, Cout, H*W), lane-dense

    out = pl.pallas_call(
        kernel,
        out_shape=jax.ShapeDtypeStruct((N, Cout, H * W), jnp.float32),
        grid=(N,),
        in_specs=[
            pl.BlockSpec((1, Cin, Hp, Wp), lambda n: (n, 0, 0, 0)),
            # constant index_map -> Pallas skips re-DMA of these blocks after step 0;
            # at production weight sizes also single-buffer them (pl.Buffered(1)).
            pl.BlockSpec((Cout, 9 * Cin), lambda n: (0, 0)),
            pl.BlockSpec((Cout, 1), lambda n: (0, 0)),
        ],
        out_specs=pl.BlockSpec((1, Cout, H * W), lambda n: (n, 0, 0)),
        compiler_params=pltpu.CompilerParams(
            dimension_semantics=("parallel",),
            vmem_limit_bytes=_VMEM_LIMIT_BYTES),
    )(xp, w2, b2)
    return out.reshape(N, Cout, H, W)          # free reshape; stays NCHW


# ----------------------------------------------------------------------------
# Pallas kernel 2: classify == filter_layer.apply_filter
#   grouped correlation of each sequence's (C, fh, fw) filter with its test features,
#   padding = fh // 2.  One grid step per SEQUENCE: the filter is DMA'd once and all
#   n_img test images of the sequence are processed in the step; the (1, n_img, Ho*Wo)
#   output block uses n_img sublanes.  MXU formulation per image:
#   (1, K) x (K, Ho*Wo) for small C, fh*fw accumulating (1, C) x (C, Ho*Wo) dots otherwise.
# ----------------------------------------------------------------------------
def apply_filter(feat, weights, *, compute_dtype=jnp.bfloat16):
    """feat: (n_img, n_seq, C, H, W); weights: (n_seq, C, fh, fw) -> (n_img, n_seq, Ho, Wo)."""
    n_img, n_seq, C, H, W = feat.shape
    fh, fw = weights.shape[-2], weights.shape[-1]
    ph, pw = fh // 2, fw // 2
    Ho, Wo = H + 2 * ph - fh + 1, W + 2 * pw - fw + 1
    Hp, Wp = H + 2 * ph, W + 2 * pw
    K = fh * fw * C
    per_tap = C >= _PER_TAP_MIN_C

    xp = jnp.pad(feat.astype(compute_dtype),
                 ((0, 0), (0, 0), (0, 0), (ph, ph), (pw, pw)))
    # (n_seq, C, fh, fw) -> (n_seq, fh, fw, C) -> (n_seq, 1, K); row order (kh, kw, c)
    wf = jnp.transpose(weights, (0, 2, 3, 1)).reshape(n_seq, 1, K).astype(compute_dtype)

    def kernel(x_ref, w_ref, o_ref):
        def tap(n, kh, kw):
            # slice the Ref directly per tap
            return x_ref[n, 0, :, kh:kh + Ho, kw:kw + Wo].reshape(C, Ho * Wo)

        for n in range(n_img):                                  # static unroll
            if per_tap:
                score = jnp.zeros((1, Ho * Wo), jnp.float32)
                for t in range(fh * fw):
                    kh, kw = divmod(t, fw)
                    score = score + jnp.dot(w_ref[0, :, t * C:(t + 1) * C], tap(n, kh, kw),
                                            preferred_element_type=jnp.float32)
            else:
                im2col = jnp.concatenate(
                    [tap(n, kh, kw) for kh in range(fh) for kw in range(fw)], axis=0)
                score = jnp.dot(w_ref[0], im2col,
                                preferred_element_type=jnp.float32)   # (1, Ho*Wo)
            o_ref[0, n:n + 1, :] = score.astype(o_ref.dtype)    # row n of the seq block

    out = pl.pallas_call(
        kernel,
        out_shape=jax.ShapeDtypeStruct((n_seq, n_img, Ho * Wo), jnp.float32),
        grid=(n_seq,),
        in_specs=[
            pl.BlockSpec((n_img, 1, C, Hp, Wp), lambda sq: (0, sq, 0, 0, 0)),
            pl.BlockSpec((1, 1, K), lambda sq: (sq, 0, 0)),     # filter DMA'd once/seq
        ],
        out_specs=pl.BlockSpec((1, n_img, Ho * Wo), lambda sq: (sq, 0, 0)),
        compiler_params=pltpu.CompilerParams(
            dimension_semantics=("parallel",),
            vmem_limit_bytes=_VMEM_LIMIT_BYTES),
    )(xp, wf)
    # cheap transpose of the small score tensor back to (n_img, n_seq, Ho, Wo)
    return jnp.transpose(out.reshape(n_seq, n_img, Ho, Wo), (1, 0, 2, 3))


# ----------------------------------------------------------------------------
# Filter initializer (small, data-dependent pooling -> plain JAX glue)
# ----------------------------------------------------------------------------
def filter_initializer(feat, bb, filter_size, feat_stride):
    # feat: (n_img, n_seq, C, H, W); bb: (n_img, n_seq, 4) = (x, y, w, h) in image coords.
    # Adaptive box-overlap average pooling of the feature inside the box to (fs, fs),
    # then mean over train images -> (n_seq, C, fs, fs).
    # TODO(synk): exact PrRoIPool2D bilinear integration (and box clipping to the feature
    # map); box-overlap averaging used instead.
    n_img, n_seq, C, H, W = feat.shape
    fs = filter_size
    x0 = bb[..., 0] / feat_stride
    y0 = bb[..., 1] / feat_stride
    bw = jnp.maximum(bb[..., 2] / feat_stride, 1e-3)
    bh = jnp.maximum(bb[..., 3] / feat_stride, 1e-3)
    bins = jnp.arange(fs, dtype=feat.dtype)
    by0 = y0[..., None] + bh[..., None] * bins / fs
    by1 = y0[..., None] + bh[..., None] * (bins + 1.0) / fs
    bx0 = x0[..., None] + bw[..., None] * bins / fs
    bx1 = x0[..., None] + bw[..., None] * (bins + 1.0) / fs
    hs = jnp.arange(H, dtype=feat.dtype)[None, None, None, :]
    ws = jnp.arange(W, dtype=feat.dtype)[None, None, None, :]
    oy = jnp.clip(jnp.minimum(hs + 1.0, by1[..., None])
                  - jnp.maximum(hs, by0[..., None]), 0.0)     # (n_img, n_seq, fs, H)
    ox = jnp.clip(jnp.minimum(ws + 1.0, bx1[..., None])
                  - jnp.maximum(ws, bx0[..., None]), 0.0)     # (n_img, n_seq, fs, W)
    oy = oy / jnp.maximum(oy.sum(-1, keepdims=True), 1e-6)
    ox = ox / jnp.maximum(ox.sum(-1, keepdims=True), 1e-6)
    pooled = jnp.einsum('nsih,nsjw,nschw->nscij', oy, ox, feat)   # (n_img, n_seq, C, fs, fs)
    return pooled.mean(axis=0)                                     # (n_seq, C, fs, fs)


# ----------------------------------------------------------------------------
# ContraLinearFilter.forward
# ----------------------------------------------------------------------------
def contra_linear_filter_forward(params, train_feat, test_feat, train_bb,
                                 filter_size=4, feat_stride=16,
                                 compute_dtype=jnp.bfloat16):
    assert train_bb.ndim == 3
    num_sequences = train_bb.shape[1]
    if train_feat.ndim == 5:
        train_feat = train_feat.reshape(-1, *train_feat.shape[-3:])
    if test_feat.ndim == 5:
        test_feat = test_feat.reshape(-1, *test_feat.shape[-3:])
    n_train = train_feat.shape[0]

    # Fused feature extraction: ONE conv pallas_call over train+test images (halves the
    # fixed launch/weight-DMA cost; longer, even-length "parallel" grid for v7x's 2 TCs).
    feat_all = jnp.concatenate([train_feat, test_feat], axis=0)
    cls_all = conv3x3(feat_all, params['fe_w'], params['fe_b'],
                      compute_dtype=compute_dtype)                 # (N_all, C, H, W) f32
    train_cls = cls_all[:n_train].reshape(-1, num_sequences, *cls_all.shape[-3:])
    test_cls = cls_all[n_train:].reshape(-1, num_sequences, *cls_all.shape[-3:])

    # get_filter: initializer only (filter_optimizer is None)
    weights = filter_initializer(train_cls, train_bb, filter_size, feat_stride)
    weights_iter = [weights]

    test_scores = [apply_filter(test_cls, w, compute_dtype=compute_dtype)
                   for w in weights_iter]

    # neck: flatten + Linear, done in XLA (too small for a dedicated pallas_call).
    filter_feats = jnp.stack([weights_iter[0], weights_iter[-1]], axis=0)
    filter_feats = filter_feats.reshape(num_sequences * 2, -1)   # NCHW-order flatten
    filter_feats = (jnp.dot(filter_feats, params['neck_w'],
                            preferred_element_type=jnp.float32)
                    + params['neck_b']).astype(weights.dtype)
    filter_feats = filter_feats.reshape(2, num_sequences, -1)
    return test_scores, filter_feats


# ----------------------------------------------------------------------------
if __name__ == "__main__":
    key = jax.random.PRNGKey(0)
    k_fe, k_neck, k_tr, k_te, k_bb = jax.random.split(key, 5)

    # small shapes
    n_img_train, n_img_test, n_seq = 3, 2, 2
    C_in, C_feat, H, W = 8, 16, 16, 16
    filter_size, feat_stride, neck_dim = 4, 16, 32

    # deterministic parameter init (matches the module's __init__ init scheme)
    n_fe = 3 * 3 * C_feat
    params = {
        'fe_w': jax.random.normal(k_fe, (C_feat, C_in, 3, 3), jnp.float32)
                * math.sqrt(2.0 / n_fe),
        'fe_b': jnp.zeros((C_feat,), jnp.float32),
        'neck_w': jax.random.normal(k_neck, (C_feat * filter_size * filter_size, neck_dim),
                                    jnp.float32) * 0.02,
        'neck_b': jnp.zeros((neck_dim,), jnp.float32),
    }

    train_feat = jax.random.normal(k_tr, (n_img_train, n_seq, C_in, H, W), jnp.float32)
    test_feat = jax.random.normal(k_te, (n_img_test, n_seq, C_in, H, W), jnp.float32)
    # (x, y, w, h) boxes in image coordinates (image size = H * feat_stride = 256)
    xy = jax.random.uniform(k_bb, (n_img_train, n_seq, 2), minval=32.0, maxval=144.0)
    wh = jax.random.uniform(jax.random.fold_in(k_bb, 1), (n_img_train, n_seq, 2),
                            minval=32.0, maxval=96.0)
    train_bb = jnp.concatenate([xy, wh], axis=-1)

    test_scores, filter_feats = contra_linear_filter_forward(
        params, train_feat, test_feat, train_bb,
        filter_size=filter_size, feat_stride=feat_stride)

    for s in test_scores:
        jax.block_until_ready(s)
    jax.block_until_ready(filter_feats)

    # sanity: scores (n_img_test, n_seq, H+1, W+1) for even filter_size; feats (2, n_seq, neck_dim)
    assert test_scores[0].shape == (n_img_test, n_seq, H + 1, W + 1)
    assert filter_feats.shape == (2, n_seq, neck_dim)
    print("KERNEL_OK")
</pallas_src>

<mosaic_0001>
module attributes {stable_mosaic.version = 11 : i64} {
  func.func @kernel(%arg0: i32, %arg1: memref<1x8x18x18xbf16, #tpu.memory_space<vmem>>, %arg2: memref<16x72xbf16, #tpu.memory_space<vmem>>, %arg3: memref<16x1xf32, #tpu.memory_space<vmem>>, %arg4: memref<1x16x256xf32, #tpu.memory_space<vmem>>) attributes {dimension_semantics = [#tpu.dimension_semantics<parallel>], iteration_bounds = array<i64: 10>, scalar_prefetch = 0 : i64, scratch_operands = 0 : i64, tpu.core_type = #tpu.core_type<tc>, window_params = [{transform_indices = @transform_0, window_bounds = array<i64: 1, 8, 18, 18>}, {pipeline_mode = #tpu.pipeline_mode<synchronous>, transform_indices = @transform_1, window_bounds = array<i64: 16, 72>}, {pipeline_mode = #tpu.pipeline_mode<synchronous>, transform_indices = @transform_2, window_bounds = array<i64: 16, 1>}, {transform_indices = @transform_3, window_bounds = array<i64: 1, 16, 256>}]} {
    %c0 = arith.constant 0 : index
    %c0_0 = arith.constant 0 : index
    %c0_1 = arith.constant 0 : index
    %c0_2 = arith.constant 0 : index
    %0 = vector.load %arg1[%c0, %c0_0, %c0_1, %c0_2] : memref<1x8x18x18xbf16, #tpu.memory_space<vmem>>, vector<1x8x16x16xbf16>
    %1 = vector.shape_cast %0 : vector<1x8x16x16xbf16> to vector<8x16x16xbf16>
    %2 = vector.shape_cast %1 : vector<8x16x16xbf16> to vector<8x256xbf16>
    %c0_3 = arith.constant 0 : index
    %c0_4 = arith.constant 0 : index
    %c0_5 = arith.constant 0 : index
    %c1 = arith.constant 1 : index
    %3 = vector.load %arg1[%c0_3, %c0_4, %c0_5, %c1] : memref<1x8x18x18xbf16, #tpu.memory_space<vmem>>, vector<1x8x16x16xbf16>
    %4 = vector.shape_cast %3 : vector<1x8x16x16xbf16> to vector<8x16x16xbf16>
    %5 = vector.shape_cast %4 : vector<8x16x16xbf16> to vector<8x256xbf16>
    %c0_6 = arith.constant 0 : index
    %c0_7 = arith.constant 0 : index
    %c0_8 = arith.constant 0 : index
    %c2 = arith.constant 2 : index
    %6 = vector.load %arg1[%c0_6, %c0_7, %c0_8, %c2] : memref<1x8x18x18xbf16, #tpu.memory_space<vmem>>, vector<1x8x16x16xbf16>
    %7 = vector.shape_cast %6 : vector<1x8x16x16xbf16> to vector<8x16x16xbf16>
    %8 = vector.shape_cast %7 : vector<8x16x16xbf16> to vector<8x256xbf16>
    %c0_9 = arith.constant 0 : index
    %c0_10 = arith.constant 0 : index
    %c1_11 = arith.constant 1 : index
    %c0_12 = arith.constant 0 : index
    %9 = vector.load %arg1[%c0_9, %c0_10, %c1_11, %c0_12] : memref<1x8x18x18xbf16, #tpu.memory_space<vmem>>, vector<1x8x16x16xbf16>
    %10 = vector.shape_cast %9 : vector<1x8x16x16xbf16> to vector<8x16x16xbf16>
    %11 = vector.shape_cast %10 : vector<8x16x16xbf16> to vector<8x256xbf16>
    %c0_13 = arith.constant 0 : index
    %c0_14 = arith.constant 0 : index
    %c1_15 = arith.constant 1 : index
    %c1_16 = arith.constant 1 : index
    %12 = vector.load %arg1[%c0_13, %c0_14, %c1_15, %c1_16] : memref<1x8x18x18xbf16, #tpu.memory_space<vmem>>, vector<1x8x16x16xbf16>
    %13 = vector.shape_cast %12 : vector<1x8x16x16xbf16> to vector<8x16x16xbf16>
    %14 = vector.shape_cast %13 : vector<8x16x16xbf16> to vector<8x256xbf16>
    %c0_17 = arith.constant 0 : index
    %c0_18 = arith.constant 0 : index
    %c1_19 = arith.constant 1 : index
    %c2_20 = arith.constant 2 : index
    %15 = vector.load %arg1[%c0_17, %c0_18, %c1_19, %c2_20] : memref<1x8x18x18xbf16, #tpu.memory_space<vmem>>, vector<1x8x16x16xbf16>
    %16 = vector.shape_cast %15 : vector<1x8x16x16xbf16> to vector<8x16x16xbf16>
    %17 = vector.shape_cast %16 : vector<8x16x16xbf16> to vector<8x256xbf16>
    %c0_21 = arith.constant 0 : index
    %c0_22 = arith.constant 0 : index
    %c2_23 = arith.constant 2 : index
    %c0_24 = arith.constant 0 : index
    %18 = vector.load %arg1[%c0_21, %c0_22, %c2_23, %c0_24] : memref<1x8x18x18xbf16, #tpu.memory_space<vmem>>, vector<1x8x16x16xbf16>
    %19 = vector.shape_cast %18 : vector<1x8x16x16xbf16> to vector<8x16x16xbf16>
    %20 = vector.shape_cast %19 : vector<8x16x16xbf16> to vector<8x256xbf16>
    %c0_25 = arith.constant 0 : index
    %c0_26 = arith.constant 0 : index
    %c2_27 = arith.constant 2 : index
    %c1_28 = arith.constant 1 : index
    %21 = vector.load %arg1[%c0_25, %c0_26, %c2_27, %c1_28] : memref<1x8x18x18xbf16, #tpu.memory_space<vmem>>, vector<1x8x16x16xbf16>
    %22 = vector.shape_cast %21 : vector<1x8x16x16xbf16> to vector<8x16x16xbf16>
    %23 = vector.shape_cast %22 : vector<8x16x16xbf16> to vector<8x256xbf16>
    %c0_29 = arith.constant 0 : index
    %c0_30 = arith.constant 0 : index
    %c2_31 = arith.constant 2 : index
    %c2_32 = arith.constant 2 : index
    %24 = vector.load %arg1[%c0_29, %c0_30, %c2_31, %c2_32] : memref<1x8x18x18xbf16, #tpu.memory_space<vmem>>, vector<1x8x16x16xbf16>
    %25 = vector.shape_cast %24 : vector<1x8x16x16xbf16> to vector<8x16x16xbf16>
    %26 = vector.shape_cast %25 : vector<8x16x16xbf16> to vector<8x256xbf16>
    %27 = tpu.concatenate %2, %5, %8, %11, %14, %17, %20, %23, %26 in 0 : vector<8x256xbf16>, vector<8x256xbf16>, vector<8x256xbf16>, vector<8x256xbf16>, vector<8x256xbf16>, vector<8x256xbf16>, vector<8x256xbf16>, vector<8x256xbf16>, vector<8x256xbf16> -> vector<72x256xbf16>
    %c0_33 = arith.constant 0 : index
    %c0_34 = arith.constant 0 : index
    %28 = vector.load %arg2[%c0_33, %c0_34] : memref<16x72xbf16, #tpu.memory_space<vmem>>, vector<16x72xbf16>
    %cst = arith.constant dense<0.000000e+00> : vector<16x256xf32>
    %29 = tpu.matmul %28, %27, %cst {dimension_numbers = #tpu.dot_dimension_numbers<[1], [0], [0], [1], [0, 0, 1, 1], [], []>} : vector<16x72xbf16>, vector<72x256xbf16>, vector<16x256xf32> -> vector<16x256xf32>
    %c0_35 = arith.constant 0 : index
    %c0_36 = arith.constant 0 : index
    %30 = vector.load %arg3[%c0_35, %c0_36] : memref<16x1xf32, #tpu.memory_space<vmem>>, vector<16x1xf32>
    %31 = vector.broadcast %30 : vector<16x1xf32> to vector<16x256xf32>
    %32 = arith.addf %29, %31 : vector<16x256xf32>
    %33 = vector.shape_cast %32 : vector<16x256xf32> to vector<1x16x256xf32>
    %c0_37 = arith.constant 0 : index
    %c0_38 = arith.constant 0 : index
    %c0_39 = arith.constant 0 : index
    %34 = vector.load %arg4[%c0_37, %c0_38, %c0_39] : memref<1x16x256xf32, #tpu.memory_space<vmem>>, vector<1x16x256xf32>
    tpu.vector_store %arg4[%c0_37, %c0_38, %c0_39], %33 {strides = array<i32>} : memref<1x16x256xf32, #tpu.memory_space<vmem>>, vector<1x16x256xf32>,
    return
  }
  func.func @transform_0(%arg0: i32) -> (i32, i32, i32, i32) {
    %c0_i32 = arith.constant 0 : i32
    %c0_i32_0 = arith.constant 0 : i32
    %c0_i32_1 = arith.constant 0 : i32
    %c0_i32_2 = arith.constant 0 : i32
    return %arg0, %c0_i32, %c0_i32_0, %c0_i32_1 : i32, i32, i32, i32
  }
  func.func @transform_1(%arg0: i32) -> (i32, i32) {
    %c0_i32 = arith.constant 0 : i32
    %c0_i32_0 = arith.constant 0 : i32
    %c0_i32_1 = arith.constant 0 : i32
    return %c0_i32, %c0_i32_0 : i32, i32
  }
  func.func @transform_2(%arg0: i32) -> (i32, i32) {
    %c0_i32 = arith.constant 0 : i32
    %c0_i32_0 = arith.constant 0 : i32
    %c0_i32_1 = arith.constant 0 : i32
    return %c0_i32, %c0_i32_0 : i32, i32
  }
  func.func @transform_3(%arg0: i32) -> (i32, i32, i32) {
    %c0_i32 = arith.constant 0 : i32
    %c0_i32_0 = arith.constant 0 : i32
    %c0_i32_1 = arith.constant 0 : i32
    return %arg0, %c0_i32, %c0_i32_0 : i32, i32, i32
  }
}

</mosaic_0001>

<llo_original>
// kernel: tpu_custom_call.1
$region0: #{tpu_custom_call.1}
  #allocation0 [shape = 'u32[]', space=smem, size = 0x4, offset = 0x4, fixed_abs, tag = 'smem constant byte address 0x4 - core index']
  #allocation1 [shape = 'u32[144,128]{1,0:T(1,128)}', space=vmem, size = 0x12000, scoped, tag = 'internal scratch']
  %s0 = inlined_call_operand.vmem [shape: bf16[10,8,18,18], index: 0, kind: input, shape index: {}]
  %s1 = inlined_call_operand.vmem [shape: bf16[16,72], index: 1, kind: input, shape index: {}]
  %s2 = inlined_call_operand.vmem [shape: f32[16,1], index: 2, kind: input, shape index: {}]
  %s3 = inlined_call_operand.hbm [shape: f32[10,16,256], index: 3, kind: output, shape index: {}]
  %s4 = sld [smem:[#allocation0]]
  $region45: #{tpu_custom_call.1} parent=0
    _
  %s6 = ssub.s32 1, %s4
  %s7 = scalar_select 0, %s6, %s4
  $region1: #{tpu_custom_call.1} parent=0
    #allocation2 [shape = 'u8[32768]{0}', space=vmem, size = 0x8000, scoped, tag = 'output window, operand 0']
    #allocation3 [shape = 's32[2]{0}', space=sflag, size = 0x8, scoped, tag = 'scoped memory for tpu_custom_call.1']
    %8 = vsyncpa [#allocation3], 0
    %s9 = scalar_lea.sflag [#allocation3], 1
    %10 = vsyncpa %s9, 0
    loop: start=0, step=1, limit=12
    $region2: #{tpu_custom_call.1} parent=1 // loop_pre_header
      _
    $region3: #{tpu_custom_call.1} parent=1 // loop_header
      %s12 = sphi 0, %s16
      %p13 = scmp.ge.s32.totalorder %s12, 12
      %s22 = sphi 0, %s24
      %s25 = sphi 0, %s22
      %s26 = sphi 0, %s25
      %s42 = sphi 0, %s26
      %s46 = sphi 0, %s46
      %s48 = sphi 0, %s46
      %s49 = sphi 0, %s48
      %s63 = sphi 0, %s49
      %s67 = sphi 0, %s67
      %s69 = sphi 0, %s67
      %s70 = sphi 0, %s69
      %s84 = sphi 0, %s70
      %s90 = sphi 0, %s92
      %s93 = sphi 0, %s90
      %s94 = sphi 0, %s93
      %s110 = sphi 0, %s94
    $region4: #{tpu_custom_call.1} parent=1 // loop_header_branch
      %15 = sbr.rel (%p13) target = $region8
    $region5: #{tpu_custom_call.1} parent=1 // loop_body
      %s17 = ssub.s32 %s12, 1
      %s18 = ssub.s32 %s12, 2
      %s19 = sadd.s32 %s12, 1
      %s20 = ssub.s32 %s12, %s19
      %p21 = scmp.eq.s32.totalorder %s20, 0
      %s23 = sadd.s32 %s22, 1
      %s24 = scalar_select %p21, %s22, %s23
      %p27 = pneg %p21
      %p28 = scmp.eq.s32.totalorder %s12, 9
      %p29 = por %p27, %p28
      %p30 = scmp.ne.s32.totalorder %s22, %s25
      %p31 = scmp.eq.s32.totalorder %s12, 0
      %p32 = por %p30, %p31
      %p33 = scmp.ne.s32.totalorder %s22, %s25
      %p34 = scmp.eq.s32.totalorder %s17, 9
      %p35 = por %p33, %p34
      %p36 = scmp.ne.s32.totalorder %s25, %s26
      %p37 = scmp.eq.s32.totalorder %s17, 0
      %p38 = por %p36, %p37
      %p39 = scmp.ne.s32.totalorder %s25, %s26
      %p40 = scmp.eq.s32.totalorder %s18, 9
      %p41 = por %p39, %p40
      %p43 = scmp.ne.s32.totalorder %s26, %s42
      %p44 = scmp.eq.s32.totalorder %s18, 0
      %p45 = por %p43, %p44
      %s47 = sadd.s32 %s46, 1
      %p50 = scmp.eq.s32.totalorder %s12, 9
      %p51 = scmp.ne.s32.totalorder %s46, %s48
      %p52 = scmp.eq.s32.totalorder %s12, 0
      %p53 = por %p51, %p52
      %p54 = scmp.ne.s32.totalorder %s46, %s48
      %p55 = scmp.eq.s32.totalorder %s17, 9
      %p56 = por %p54, %p55
      %p57 = scmp.ne.s32.totalorder %s48, %s49
      %p58 = scmp.eq.s32.totalorder %s17, 0
      %p59 = por %p57, %p58
      %p60 = scmp.ne.s32.totalorder %s48, %s49
      %p61 = scmp.eq.s32.totalorder %s18, 9
      %p62 = por %p60, %p61
      %p64 = scmp.ne.s32.totalorder %s49, %s63
      %p65 = scmp.eq.s32.totalorder %s18, 0
      %p66 = por %p64, %p65
      %s68 = sadd.s32 %s67, 1
      %p71 = scmp.eq.s32.totalorder %s12, 9
      %p72 = scmp.ne.s32.totalorder %s67, %s69
      %p73 = scmp.eq.s32.totalorder %s12, 0
      %p74 = por %p72, %p73
      %p75 = scmp.ne.s32.totalorder %s67, %s69
      %p76 = scmp.eq.s32.totalorder %s17, 9
      %p77 = por %p75, %p76
      %p78 = scmp.ne.s32.totalorder %s69, %s70
      %p79 = scmp.eq.s32.totalorder %s17, 0
      %p80 = por %p78, %p79
      %p81 = scmp.ne.s32.totalorder %s69, %s70
      %p82 = scmp.eq.s32.totalorder %s18, 9
      %p83 = por %p81, %p82
      %p85 = scmp.ne.s32.totalorder %s70, %s84
      %p86 = scmp.eq.s32.totalorder %s18, 0
      %p87 = por %p85, %p86
      %s88 = ssub.s32 %s12, %s19
      %p89 = scmp.eq.s32.totalorder %s88, 0
      %s91 = sadd.s32 %s90, 1
      %s92 = scalar_select %p89, %s90, %s91
      %p95 = pneg %p89
      %p96 = scmp.eq.s32.totalorder %s12, 9
      %p97 = por %p95, %p96
      %p98 = scmp.ne.s32.totalorder %s90, %s93
      %p99 = scmp.eq.s32.totalorder %s12, 0
      %p100 = por %p98, %p99
      %p101 = scmp.ne.s32.totalorder %s90, %s93
      %p102 = scmp.eq.s32.totalorder %s17, 9
      %p103 = por %p101, %p102
      %p104 = scmp.ne.s32.totalorder %s93, %s94
      %p105 = scmp.eq.s32.totalorder %s17, 0
      %p106 = por %p104, %p105
      %p107 = scmp.ne.s32.totalorder %s93, %s94
      %p108 = scmp.eq.s32.totalorder %s18, 9
      %p109 = por %p107, %p108
      %p111 = scmp.ne.s32.totalorder %s94, %s110
      %p112 = scmp.eq.s32.totalorder %s18, 0
      %p113 = por %p111, %p112
      %p114 = scmp.le.s32.totalorder 1, %s12
      %p115 = scmp.lt.s32.totalorder %s12, 11
      %p116 = pnand %p114, %p115
      %p117 = pneg %p116
      // Predicated region
      $region9: #{tpu_custom_call.1} parent=5 // pred_check
        _
      $region10: #{tpu_custom_call.1} parent=5 // pred_check_branch
        %119 = sbr.rel (%p116) target = $region12
      $region11: #{tpu_custom_call.1} parent=5 // pred_region
        %s120 = ssub.s32 %s12, 1
        // Predicated region
        $region13: #{tpu_custom_call.1} parent=11 // pred_check
          %p121 = pneg %p59
        $region14: #{tpu_custom_call.1} parent=11 // pred_check_branch
          %123 = sbr.rel (%p121) target = $region16
        $region15: #{tpu_custom_call.1} parent=11 // pred_region
          _
        $region16: #{tpu_custom_call.1} parent=11 // pred_fallthru
          _
        // Predicated region
        $region17: #{tpu_custom_call.1} parent=11 // pred_check
          %p124 = pneg %p80
        $region18: #{tpu_custom_call.1} parent=11 // pred_check_branch
          %126 = sbr.rel (%p124) target = $region20
        $region19: #{tpu_custom_call.1} parent=11 // pred_region
          _
        $region20: #{tpu_custom_call.1} parent=11 // pred_fallthru
          _
      $region12: #{tpu_custom_call.1} parent=5 // pred_fallthru
        _
      %p127 = scmp.lt.s32.totalorder %s12, 10
      // Predicated region
      $region21: #{tpu_custom_call.1} parent=5 // pred_check
        %p128 = pneg %p127
      $region22: #{tpu_custom_call.1} parent=5 // pred_check_branch
        %130 = sbr.rel (%p128) target = $region24
      $region23: #{tpu_custom_call.1} parent=5 // pred_region
        // Predicated region
        $region25: #{tpu_custom_call.1} parent=23 // pred_check
          %p131 = pneg %p32
        $region26: #{tpu_custom_call.1} parent=23 // pred_check_branch
          %133 = sbr.rel (%p131) target = $region28
        $region27: #{tpu_custom_call.1} parent=23 // pred_region
          %p134 = scmp.lt.s32.totalorder %s12, 9
          %s135 = scalar_select %p134, %s12, 9
          %s136 = smul.addr %s135, 24
          %s137 = smul.addr %s136, 4
          %s138 = scalar_lea.vmem %s0, %s137
        $region28: #{tpu_custom_call.1} parent=23 // pred_fallthru
          _
      $region24: #{tpu_custom_call.1} parent=5 // pred_fallthru
        _
      %p139 = scmp.le.s32.totalorder 1, %s12
      %p140 = scmp.lt.s32.totalorder %s12, 11
      %p141 = pnand %p139, %p140
      %p142 = pneg %p141
      // Predicated region
      $region29: #{tpu_custom_call.1} parent=5 // pred_check
        _
      $region30: #{tpu_custom_call.1} parent=5 // pred_check_branch
        %144 = sbr.rel (%p141) target = $region32
      $region31: #{tpu_custom_call.1} parent=5 // pred_region
        %s145 = ssub.s32 %s12, 1
        %p146 = scmp.lt.s32.totalorder %s17, 9
        %s147 = scalar_select %p146, %s17, 9
        %s148 = smul.addr %s147, 24
        %s149 = smul.addr %s148, 4
        %s150 = scalar_lea.vmem %s0, %s149
        %p151 = pneg %p38
        %p152 = pneg %p35
        %p153 = pneg %p59
        %p154 = pneg %p56
        %p155 = pneg %p80
        %p156 = pneg %p77
        %p157 = pneg %p106
        %p158 = pneg %p103
        %s159 = sand.u32 %s93, 1
        %s160 = scalar_lea.sflag [#allocation3], %s159
        %s161 = sand.u32 %s93, 1
        %s162 = smul.addr %s161, 32
        %s163 = scalar_lea.vmem [#allocation2], %s162
        %p164 = scmp.lt.s32.totalorder %s17, 9
        %s165 = scalar_select %p164, %s17, 9
        %s166 = smul.addr %s165, 24
        %s167 = smul.addr %s166, 4
        %s168 = scalar_lea.vmem %s0, %s167
        %v170 = vld [vmem:[%s168] sm:$0xf]
        %v171 = vld [vmem:[%s168 + $0x4] sm:$0xf]
        %v172 = vld [vmem:[%s168 + $0xc] sm:$0xf]
        %v173 = vld [vmem:[%s168 + $0x10] sm:$0xf]
        %v174 = vld [vmem:[%s168 + $0x18] sm:$0xf]
        %v175 = vld [vmem:[%s168 + $0x1c] sm:$0xf]
        %v176 = vld [vmem:[%s168 + $0x24] sm:$0xf]
        %v177 = vld [vmem:[%s168 + $0x28] sm:$0xf]
        %v178 = vld [vmem:[%s168 + $0x30] sm:$0xf]
        %v179 = vld [vmem:[%s168 + $0x34] sm:$0xf]
        %v180 = vld [vmem:[%s168 + $0x3c] sm:$0xf]
        %v181 = vld [vmem:[%s168 + $0x40] sm:$0xf]
        %v182 = vld [vmem:[%s168 + $0x48] sm:$0xf]
        %v183 = vld [vmem:[%s168 + $0x4c] sm:$0xf]
        %v184 = vld [vmem:[%s168 + $0x54] sm:$0xf]
        %v185 = vld [vmem:[%s168 + $0x58] sm:$0xf]
        %v186 = vcombine.low %v170, %v178
        %v188 = vunpack.c.l.s4 1983009808
        %v189 = vunpack.c.0.s8 %v188
        %v190 = vlaneseq
        %v191 = vshrl.u32 %v190, 7
        %v192 = vsub.s32 %v189, %v191
        %v193 = vrot.slane %v186, %v192
        %v194 = vcombine.low %v174, %v182
        %v196 = vunpack.c.l.s4 1983009808
        %v197 = vunpack.c.0.s8 %v196
        %v198 = vlaneseq
        %v199 = vshrl.u32 %v198, 7
        %v200 = vsub.s32 %v197, %v199
        %v201 = vrot.slane %v194, %v200
        %v202 = vcombine.low %v193, %v201
        %v203 = vcombine.high %v193, %v201
        %v205 = vunpack.c.l.s4 1934713408
        %v206 = vunpack.c.0.s8 %v205
        %v207 = vlaneseq
        %v208 = vshrl.u32 %v207, 7
        %v209 = vsub.s32 %v206, %v208
        %v210 = vrot.slane %v202, %v209
        %v212 = vunpack.c.l.s4 1934713408
        %v213 = vunpack.c.0.s8 %v212
        %v214 = vlaneseq
        %v215 = vshrl.u32 %v214, 7
        %v216 = vsub.s32 %v213, %v215
        %v217 = vrot.slane %v203, %v216
        %v218 = vcombine.high %v210, 0
        %v219 = vcombine.high %v217, 0
        %v220 = vcombine.low %v172, %v180
        %v222 = vunpack.c.l.s4 1983009808
        %v223 = vunpack.c.0.s8 %v222
        %v224 = vlaneseq
        %v225 = vshrl.u32 %v224, 7
        %v226 = vsub.s32 %v223, %v225
        %v227 = vrot.slane %v220, %v226
        %v228 = vcombine.low %v176, %v184
        %v230 = vunpack.c.l.s4 1983009808
        %v231 = vunpack.c.0.s8 %v230
        %v232 = vlaneseq
        %v233 = vshrl.u32 %v232, 7
        %v234 = vsub.s32 %v231, %v233
        %v235 = vrot.slane %v228, %v234
        %v236 = vcombine.low %v227, %v235
        %v237 = vcombine.high %v227, %v235
        %v239 = vunpack.c.l.s4 1934713408
        %v240 = vunpack.c.0.s8 %v239
        %v241 = vlaneseq
        %v242 = vshrl.u32 %v241, 7
        %v243 = vsub.s32 %v240, %v242
        %v244 = vrot.slane %v236, %v243
        %v246 = vunpack.c.l.s4 1934713408
        %v247 = vunpack.c.0.s8 %v246
        %v248 = vlaneseq
        %v249 = vshrl.u32 %v248, 7
        %v250 = vsub.s32 %v247, %v249
        %v251 = vrot.slane %v237, %v250
        %v252 = vcombine.high %v244, 0
        %v253 = vcombine.high %v251, 0
        %v254 = vcombine.low %v171, %v179
        %v256 = vunpack.c.l.s4 1983009808
        %v257 = vunpack.c.0.s8 %v256
        %v258 = vlaneseq
        %v259 = vshrl.u32 %v258, 7
        %v260 = vsub.s32 %v257, %v259
        %v261 = vrot.slane %v254, %v260
        %v262 = vcombine.low %v175, %v183
        %v264 = vunpack.c.l.s4 1983009808
        %v265 = vunpack.c.0.s8 %v264
        %v266 = vlaneseq
        %v267 = vshrl.u32 %v266, 7
        %v268 = vsub.s32 %v265, %v267
        %v269 = vrot.slane %v262, %v268
        %v270 = vcombine.low %v261, %v269
        %v271 = vcombine.high %v261, %v269
        %v273 = vunpack.c.l.s4 1934713408
        %v274 = vunpack.c.0.s8 %v273
        %v275 = vlaneseq
        %v276 = vshrl.u32 %v275, 7
        %v277 = vsub.s32 %v274, %v276
        %v278 = vrot.slane %v270, %v277
        %v280 = vunpack.c.l.s4 1934713408
        %v281 = vunpack.c.0.s8 %v280
        %v282 = vlaneseq
        %v283 = vshrl.u32 %v282, 7
        %v284 = vsub.s32 %v281, %v283
        %v285 = vrot.slane %v271, %v284
        %v286 = vcombine.high %v278, 0
        %v287 = vcombine.high %v285, 0
        %v288 = vcombine.low %v173, %v181
        %v290 = vunpack.c.l.s4 1983009808
        %v291 = vunpack.c.0.s8 %v290
        %v292 = vlaneseq
        %v293 = vshrl.u32 %v292, 7
        %v294 = vsub.s32 %v291, %v293
        %v295 = vrot.slane %v288, %v294
        %v296 = vcombine.low %v177, %v185
        %v298 = vunpack.c.l.s4 1983009808
        %v299 = vunpack.c.0.s8 %v298
        %v300 = vlaneseq
        %v301 = vshrl.u32 %v300, 7
        %v302 = vsub.s32 %v299, %v301
        %v303 = vrot.slane %v296, %v302
        %v304 = vcombine.low %v295, %v303
        %v305 = vcombine.high %v295, %v303
        %v307 = vunpack.c.l.s4 1934713408
        %v308 = vunpack.c.0.s8 %v307
        %v309 = vlaneseq
        %v310 = vshrl.u32 %v309, 7
        %v311 = vsub.s32 %v308, %v310
        %v312 = vrot.slane %v304, %v311
        %v314 = vunpack.c.l.s4 1934713408
        %v315 = vunpack.c.0.s8 %v314
        %v316 = vlaneseq
        %v317 = vshrl.u32 %v316, 7
        %v318 = vsub.s32 %v315, %v317
        %v319 = vrot.slane %v305, %v318
        %v320 = vcombine.high %v312, 0
        %v321 = vcombine.high %v319, 0
        %v324 = vpack.i.b16 %v244, %v210
        %v325 = vshrl.u32 %v210, 16
        %v326 = vshrl.u32 %v244, 16
        %v327 = vpack.i.b16 %v326, %v325
        %v330 = vpack.i.b16 %v252, %v218
        %v331 = vshrl.u32 %v218, 16
        %v332 = vshrl.u32 %v252, 16
        %v333 = vpack.i.b16 %v332, %v331
        %v336 = vpack.i.b16 %v251, %v217
        %v337 = vshrl.u32 %v217, 16
        %v338 = vshrl.u32 %v251, 16
        %v339 = vpack.i.b16 %v338, %v337
        %v342 = vpack.i.b16 %v253, %v219
        %v343 = vshrl.u32 %v219, 16
        %v344 = vshrl.u32 %v253, 16
        %v345 = vpack.i.b16 %v344, %v343
        %v348 = vpack.i.b16 %v312, %v278
        %v349 = vshrl.u32 %v278, 16
        %v350 = vshrl.u32 %v312, 16
        %v351 = vpack.i.b16 %v350, %v349
        %v354 = vpack.i.b16 %v320, %v286
        %v355 = vshrl.u32 %v286, 16
        %v356 = vshrl.u32 %v320, 16
        %v357 = vpack.i.b16 %v356, %v355
        %v360 = vpack.i.b16 %v319, %v285
        %v361 = vshrl.u32 %v285, 16
        %v362 = vshrl.u32 %v319, 16
        %v363 = vpack.i.b16 %v362, %v361
        %v366 = vpack.i.b16 %v321, %v287
        %v367 = vshrl.u32 %v287, 16
        %v368 = vshrl.u32 %v321, 16
        %v369 = vpack.i.b16 %v368, %v367
        %v370 = vunpack.c.l.b16 %v327
        %v371 = vpack.c.b16 %v370, %v370
        %372 = vrot.lane.b32.xlu0 %v371, 16
        %v373 = vpop.permute.xlu0 %372
        %v374 = vunpack.c.l.b16 %v330
        %v375 = vpack.c.b16 %v374, %v374
        %376 = vrot.lane.b32.xlu0 %v375, 32
        %v377 = vpop.permute.xlu0 %376
        %v378 = vunpack.c.l.b16 %v333
        %v379 = vpack.c.b16 %v378, %v378
        %380 = vrot.lane.b32.xlu0 %v379, 48
        %v381 = vpop.permute.xlu0 %380
        %v382 = vunpack.c.l.b16 %v336
        %v383 = vpack.c.b16 %v382, %v382
        %384 = vrot.lane.b32.xlu0 %v383, 64
        %v385 = vpop.permute.xlu0 %384
        %v386 = vunpack.c.l.b16 %v339
        %v387 = vpack.c.b16 %v386, %v386
        %388 = vrot.lane.b32.xlu0 %v387, 80
        %v389 = vpop.permute.xlu0 %388
        %v390 = vunpack.c.l.b16 %v342
        %v391 = vpack.c.b16 %v390, %v390
        %392 = vrot.lane.b32.xlu0 %v391, 96
        %v393 = vpop.permute.xlu0 %392
        %v394 = vunpack.c.l.b16 %v345
        %v395 = vpack.c.b16 %v394, %v394
        %396 = vrot.lane.b32.xlu0 %v395, 112
        %v397 = vpop.permute.xlu0 %396
        %v398 = vunpack.c.l.b16 %v351
        %v399 = vpack.c.b16 %v398, %v398
        %400 = vrot.lane.b32.xlu0 %v399, 16
        %v401 = vpop.permute.xlu0 %400
        %v402 = vunpack.c.l.b16 %v354
        %v403 = vpack.c.b16 %v402, %v402
        %404 = vrot.lane.b32.xlu0 %v403, 32
        %v405 = vpop.permute.xlu0 %404
        %v406 = vunpack.c.l.b16 %v357
        %v407 = vpack.c.b16 %v406, %v406
        %408 = vrot.lane.b32.xlu0 %v407, 48
        %v409 = vpop.permute.xlu0 %408
        %v410 = vunpack.c.l.b16 %v360
        %v411 = vpack.c.b16 %v410, %v410
        %412 = vrot.lane.b32.xlu0 %v411, 64
        %v413 = vpop.permute.xlu0 %412
        %v414 = vunpack.c.l.b16 %v363
        %v415 = vpack.c.b16 %v414, %v414
        %416 = vrot.lane.b32.xlu0 %v415, 80
        %v417 = vpop.permute.xlu0 %416
        %v418 = vunpack.c.l.b16 %v366
        %v419 = vpack.c.b16 %v418, %v418
        %420 = vrot.lane.b32.xlu0 %v419, 96
        %v421 = vpop.permute.xlu0 %420
        %v422 = vunpack.c.l.b16 %v369
        %v423 = vpack.c.b16 %v422, %v422
        %424 = vrot.lane.b32.xlu0 %v423, 112
        %v425 = vpop.permute.xlu0 %424
        %vm426 = vcmask 130048
        %v429 = vsel %vm426, %v324, %v373
        %vm430 = vcmask 261120
        %v432 = vsel %vm430, %v429, %v377
        %vm433 = vcmask 392192
        %v435 = vsel %vm433, %v432, %v381
        %vm436 = vcmask 523264
        %v438 = vsel %vm436, %v435, %v385
        %vm439 = vcmask 654336
        %v441 = vsel %vm439, %v438, %v389
        %vm442 = vcmask 785408
        %v444 = vsel %vm442, %v441, %v393
        %vm445 = vcmask 916480
        %v447 = vsel %vm445, %v444, %v397
        %v450 = vsel %vm426, %v348, %v401
        %v452 = vsel %vm430, %v450, %v405
        %v454 = vsel %vm433, %v452, %v409
        %v456 = vsel %vm436, %v454, %v413
        %v458 = vsel %vm439, %v456, %v417
        %v460 = vsel %vm442, %v458, %v421
        %v462 = vsel %vm445, %v460, %v425
        %479 = vrot.lane.b32.xlu0 %v170, 127
        %v480 = vpop.permute.xlu0 %479
        %481 = vrot.lane.b32.xlu0 %v171, 127
        %v482 = vpop.permute.xlu0 %481
        %483 = vrot.lane.b32.xlu0 %v172, 127
        %v484 = vpop.permute.xlu0 %483
        %485 = vrot.lane.b32.xlu0 %v173, 127
        %v486 = vpop.permute.xlu0 %485
        %487 = vrot.lane.b32.xlu0 %v174, 127
        %v488 = vpop.permute.xlu0 %487
        %489 = vrot.lane.b32.xlu0 %v175, 127
        %v490 = vpop.permute.xlu0 %489
        %491 = vrot.lane.b32.xlu0 %v176, 127
        %v492 = vpop.permute.xlu0 %491
        %493 = vrot.lane.b32.xlu0 %v177, 127
        %v494 = vpop.permute.xlu0 %493
        %495 = vrot.lane.b32.xlu0 %v178, 127
        %v496 = vpop.permute.xlu0 %495
        %497 = vrot.lane.b32.xlu0 %v179, 127
        %v498 = vpop.permute.xlu0 %497
        %499 = vrot.lane.b32.xlu0 %v180, 127
        %v500 = vpop.permute.xlu0 %499
        %501 = vrot.lane.b32.xlu0 %v181, 127
        %v502 = vpop.permute.xlu0 %501
        %503 = vrot.lane.b32.xlu0 %v182, 127
        %v504 = vpop.permute.xlu0 %503
        %505 = vrot.lane.b32.xlu0 %v183, 127
        %v506 = vpop.permute.xlu0 %505
        %507 = vrot.lane.b32.xlu0 %v184, 127
        %v508 = vpop.permute.xlu0 %507
        %509 = vrot.lane.b32.xlu0 %v185, 127
        %v510 = vpop.permute.xlu0 %509
        %v527 = vcombine.low %v480, %v496
        %v529 = vunpack.c.l.s4 1983009808
        %v530 = vunpack.c.0.s8 %v529
        %v531 = vlaneseq
        %v532 = vshrl.u32 %v531, 7
        %v533 = vsub.s32 %v530, %v532
        %v534 = vrot.slane %v527, %v533
        %v535 = vcombine.low %v488, %v504
        %v537 = vunpack.c.l.s4 1983009808
        %v538 = vunpack.c.0.s8 %v537
        %v539 = vlaneseq
        %v540 = vshrl.u32 %v539, 7
        %v541 = vsub.s32 %v538, %v540
        %v542 = vrot.slane %v535, %v541
        %v543 = vcombine.low %v534, %v542
        %v544 = vcombine.high %v534, %v542
        %v546 = vunpack.c.l.s4 1934713408
        %v547 = vunpack.c.0.s8 %v546
        %v548 = vlaneseq
        %v549 = vshrl.u32 %v548, 7
        %v550 = vsub.s32 %v547, %v549
        %v551 = vrot.slane %v543, %v550
        %v553 = vunpack.c.l.s4 1934713408
        %v554 = vunpack.c.0.s8 %v553
        %v555 = vlaneseq
        %v556 = vshrl.u32 %v555, 7
        %v557 = vsub.s32 %v554, %v556
        %v558 = vrot.slane %v544, %v557
        %v559 = vcombine.high %v551, 0
        %v560 = vcombine.high %v558, 0
        %v561 = vcombine.low %v484, %v500
        %v563 = vunpack.c.l.s4 1983009808
        %v564 = vunpack.c.0.s8 %v563
        %v565 = vlaneseq
        %v566 = vshrl.u32 %v565, 7
        %v567 = vsub.s32 %v564, %v566
        %v568 = vrot.slane %v561, %v567
        %v569 = vcombine.low %v492, %v508
        %v571 = vunpack.c.l.s4 1983009808
        %v572 = vunpack.c.0.s8 %v571
        %v573 = vlaneseq
        %v574 = vshrl.u32 %v573, 7
        %v575 = vsub.s32 %v572, %v574
        %v576 = vrot.slane %v569, %v575
        %v577 = vcombine.low %v568, %v576
        %v578 = vcombine.high %v568, %v576
        %v580 = vunpack.c.l.s4 1934713408
        %v581 = vunpack.c.0.s8 %v580
        %v582 = vlaneseq
        %v583 = vshrl.u32 %v582, 7
        %v584 = vsub.s32 %v581, %v583
        %v585 = vrot.slane %v577, %v584
        %v587 = vunpack.c.l.s4 1934713408
        %v588 = vunpack.c.0.s8 %v587
        %v589 = vlaneseq
        %v590 = vshrl.u32 %v589, 7
        %v591 = vsub.s32 %v588, %v590
        %v592 = vrot.slane %v578, %v591
        %v593 = vcombine.high %v585, 0
        %v594 = vcombine.high %v592, 0
        %v595 = vcombine.low %v482, %v498
        %v597 = vunpack.c.l.s4 1983009808
        %v598 = vunpack.c.0.s8 %v597
        %v599 = vlaneseq
        %v600 = vshrl.u32 %v599, 7
        %v601 = vsub.s32 %v598, %v600
        %v602 = vrot.slane %v595, %v601
        %v603 = vcombine.low %v490, %v506
        %v605 = vunpack.c.l.s4 1983009808
        %v606 = vunpack.c.0.s8 %v605
        %v607 = vlaneseq
        %v608 = vshrl.u32 %v607, 7
        %v609 = vsub.s32 %v606, %v608
        %v610 = vrot.slane %v603, %v609
        %v611 = vcombine.low %v602, %v610
        %v612 = vcombine.high %v602, %v610
        %v614 = vunpack.c.l.s4 1934713408
        %v615 = vunpack.c.0.s8 %v614
        %v616 = vlaneseq
        %v617 = vshrl.u32 %v616, 7
        %v618 = vsub.s32 %v615, %v617
        %v619 = vrot.slane %v611, %v618
        %v621 = vunpack.c.l.s4 1934713408
        %v622 = vunpack.c.0.s8 %v621
        %v623 = vlaneseq
        %v624 = vshrl.u32 %v623, 7
        %v625 = vsub.s32 %v622, %v624
        %v626 = vrot.slane %v612, %v625
        %v627 = vcombine.high %v619, 0
        %v628 = vcombine.high %v626, 0
        %v629 = vcombine.low %v486, %v502
        %v631 = vunpack.c.l.s4 1983009808
        %v632 = vunpack.c.0.s8 %v631
        %v633 = vlaneseq
        %v634 = vshrl.u32 %v633, 7
        %v635 = vsub.s32 %v632, %v634
        %v636 = vrot.slane %v629, %v635
        %v637 = vcombine.low %v494, %v510
        %v639 = vunpack.c.l.s4 1983009808
        %v640 = vunpack.c.0.s8 %v639
        %v641 = vlaneseq
        %v642 = vshrl.u32 %v641, 7
        %v643 = vsub.s32 %v640, %v642
        %v644 = vrot.slane %v637, %v643
        %v645 = vcombine.low %v636, %v644
        %v646 = vcombine.high %v636, %v644
        %v648 = vunpack.c.l.s4 1934713408
        %v649 = vunpack.c.0.s8 %v648
        %v650 = vlaneseq
        %v651 = vshrl.u32 %v650, 7
        %v652 = vsub.s32 %v649, %v651
        %v653 = vrot.slane %v645, %v652
        %v655 = vunpack.c.l.s4 1934713408
        %v656 = vunpack.c.0.s8 %v655
        %v657 = vlaneseq
        %v658 = vshrl.u32 %v657, 7
        %v659 = vsub.s32 %v656, %v658
        %v660 = vrot.slane %v646, %v659
        %v661 = vcombine.high %v653, 0
        %v662 = vcombine.high %v660, 0
        %v665 = vpack.i.b16 %v585, %v551
        %v666 = vshrl.u32 %v551, 16
        %v667 = vshrl.u32 %v585, 16
        %v668 = vpack.i.b16 %v667, %v666
        %v671 = vpack.i.b16 %v593, %v559
        %v672 = vshrl.u32 %v559, 16
        %v673 = vshrl.u32 %v593, 16
        %v674 = vpack.i.b16 %v673, %v672
        %v677 = vpack.i.b16 %v592, %v558
        %v678 = vshrl.u32 %v558, 16
        %v679 = vshrl.u32 %v592, 16
        %v680 = vpack.i.b16 %v679, %v678
        %v683 = vpack.i.b16 %v594, %v560
        %v684 = vshrl.u32 %v560, 16
        %v685 = vshrl.u32 %v594, 16
        %v686 = vpack.i.b16 %v685, %v684
        %v689 = vpack.i.b16 %v653, %v619
        %v690 = vshrl.u32 %v619, 16
        %v691 = vshrl.u32 %v653, 16
        %v692 = vpack.i.b16 %v691, %v690
        %v695 = vpack.i.b16 %v661, %v627
        %v696 = vshrl.u32 %v627, 16
        %v697 = vshrl.u32 %v661, 16
        %v698 = vpack.i.b16 %v697, %v696
        %v701 = vpack.i.b16 %v660, %v626
        %v702 = vshrl.u32 %v626, 16
        %v703 = vshrl.u32 %v660, 16
        %v704 = vpack.i.b16 %v703, %v702
        %v707 = vpack.i.b16 %v662, %v628
        %v708 = vshrl.u32 %v628, 16
        %v709 = vshrl.u32 %v662, 16
        %v710 = vpack.i.b16 %v709, %v708
        %v711 = vunpack.c.l.b16 %v668
        %v712 = vpack.c.b16 %v711, %v711
        %713 = vrot.lane.b32.xlu0 %v712, 16
        %v714 = vpop.permute.xlu0 %713
        %v715 = vunpack.c.l.b16 %v671
        %v716 = vpack.c.b16 %v715, %v715
        %717 = vrot.lane.b32.xlu0 %v716, 32
        %v718 = vpop.permute.xlu0 %717
        %v719 = vunpack.c.l.b16 %v674
        %v720 = vpack.c.b16 %v719, %v719
        %721 = vrot.lane.b32.xlu0 %v720, 48
        %v722 = vpop.permute.xlu0 %721
        %v723 = vunpack.c.l.b16 %v677
        %v724 = vpack.c.b16 %v723, %v723
        %725 = vrot.lane.b32.xlu0 %v724, 64
        %v726 = vpop.permute.xlu0 %725
        %v727 = vunpack.c.l.b16 %v680
        %v728 = vpack.c.b16 %v727, %v727
        %729 = vrot.lane.b32.xlu0 %v728, 80
        %v730 = vpop.permute.xlu0 %729
        %v731 = vunpack.c.l.b16 %v683
        %v732 = vpack.c.b16 %v731, %v731
        %733 = vrot.lane.b32.xlu0 %v732, 96
        %v734 = vpop.permute.xlu0 %733
        %v735 = vunpack.c.l.b16 %v686
        %v736 = vpack.c.b16 %v735, %v735
        %737 = vrot.lane.b32.xlu0 %v736, 112
        %v738 = vpop.permute.xlu0 %737
        %v739 = vunpack.c.l.b16 %v692
        %v740 = vpack.c.b16 %v739, %v739
        %741 = vrot.lane.b32.xlu0 %v740, 16
        %v742 = vpop.permute.xlu0 %741
        %v743 = vunpack.c.l.b16 %v695
        %v744 = vpack.c.b16 %v743, %v743
        %745 = vrot.lane.b32.xlu0 %v744, 32
        %v746 = vpop.permute.xlu0 %745
        %v747 = vunpack.c.l.b16 %v698
        %v748 = vpack.c.b16 %v747, %v747
        %749 = vrot.lane.b32.xlu0 %v748, 48
        %v750 = vpop.permute.xlu0 %749
        %v751 = vunpack.c.l.b16 %v701
        %v752 = vpack.c.b16 %v751, %v751
        %753 = vrot.lane.b32.xlu0 %v752, 64
        %v754 = vpop.permute.xlu0 %753
        %v755 = vunpack.c.l.b16 %v704
        %v756 = vpack.c.b16 %v755, %v755
        %757 = vrot.lane.b32.xlu0 %v756, 80
        %v758 = vpop.permute.xlu0 %757
        %v759 = vunpack.c.l.b16 %v707
        %v760 = vpack.c.b16 %v759, %v759
        %761 = vrot.lane.b32.xlu0 %v760, 96
        %v762 = vpop.permute.xlu0 %761
        %v763 = vunpack.c.l.b16 %v710
        %v764 = vpack.c.b16 %v763, %v763
        %765 = vrot.lane.b32.xlu0 %v764, 112
        %v766 = vpop.permute.xlu0 %765
        %v769 = vsel %vm426, %v665, %v714
        %v771 = vsel %vm430, %v769, %v718
        %v773 = vsel %vm433, %v771, %v722
        %v775 = vsel %vm436, %v773, %v726
        %v777 = vsel %vm439, %v775, %v730
        %v779 = vsel %vm442, %v777, %v734
        %v781 = vsel %vm445, %v779, %v738
        %v784 = vsel %vm426, %v689, %v742
        %v786 = vsel %vm430, %v784, %v746
        %v788 = vsel %vm433, %v786, %v750
        %v790 = vsel %vm436, %v788, %v754
        %v792 = vsel %vm439, %v790, %v758
        %v794 = vsel %vm442, %v792, %v762
        %v796 = vsel %vm445, %v794, %v766
        %797 = vrot.lane.b32.xlu0 %v170, 126
        %v798 = vpop.permute.xlu0 %797
        %799 = vrot.lane.b32.xlu0 %v171, 126
        %v800 = vpop.permute.xlu0 %799
        %801 = vrot.lane.b32.xlu0 %v172, 126
        %v802 = vpop.permute.xlu0 %801
        %803 = vrot.lane.b32.xlu0 %v173, 126
        %v804 = vpop.permute.xlu0 %803
        %805 = vrot.lane.b32.xlu0 %v174, 126
        %v806 = vpop.permute.xlu0 %805
        %807 = vrot.lane.b32.xlu0 %v175, 126
        %v808 = vpop.permute.xlu0 %807
        %809 = vrot.lane.b32.xlu0 %v176, 126
        %v810 = vpop.permute.xlu0 %809
        %811 = vrot.lane.b32.xlu0 %v177, 126
        %v812 = vpop.permute.xlu0 %811
        %813 = vrot.lane.b32.xlu0 %v178, 126
        %v814 = vpop.permute.xlu0 %813
        %815 = vrot.lane.b32.xlu0 %v179, 126
        %v816 = vpop.permute.xlu0 %815
        %817 = vrot.lane.b32.xlu0 %v180, 126
        %v818 = vpop.permute.xlu0 %817
        %819 = vrot.lane.b32.xlu0 %v181, 126
        %v820 = vpop.permute.xlu0 %819
        %821 = vrot.lane.b32.xlu0 %v182, 126
        %v822 = vpop.permute.xlu0 %821
        %823 = vrot.lane.b32.xlu0 %v183, 126
        %v824 = vpop.permute.xlu0 %823
        %825 = vrot.lane.b32.xlu0 %v184, 126
        %v826 = vpop.permute.xlu0 %825
        %827 = vrot.lane.b32.xlu0 %v185, 126
        %v828 = vpop.permute.xlu0 %827
        %v845 = vcombine.low %v798, %v814
        %v847 = vunpack.c.l.s4 1983009808
        %v848 = vunpack.c.0.s8 %v847
        %v849 = vlaneseq
        %v850 = vshrl.u32 %v849, 7
        %v851 = vsub.s32 %v848, %v850
        %v852 = vrot.slane %v845, %v851
        %v853 = vcombine.low %v806, %v822
        %v855 = vunpack.c.l.s4 1983009808
        %v856 = vunpack.c.0.s8 %v855
        %v857 = vlaneseq
        %v858 = vshrl.u32 %v857, 7
        %v859 = vsub.s32 %v856, %v858
        %v860 = vrot.slane %v853, %v859
        %v861 = vcombine.low %v852, %v860
        %v862 = vcombine.high %v852, %v860
        %v864 = vunpack.c.l.s4 1934713408
        %v865 = vunpack.c.0.s8 %v864
        %v866 = vlaneseq
        %v867 = vshrl.u32 %v866, 7
        %v868 = vsub.s32 %v865, %v867
        %v869 = vrot.slane %v861, %v868
        %v871 = vunpack.c.l.s4 1934713408
        %v872 = vunpack.c.0.s8 %v871
        %v873 = vlaneseq
        %v874 = vshrl.u32 %v873, 7
        %v875 = vsub.s32 %v872, %v874
        %v876 = vrot.slane %v862, %v875
        %v877 = vcombine.high %v869, 0
        %v878 = vcombine.high %v876, 0
        %v879 = vcombine.low %v802, %v818
        %v881 = vunpack.c.l.s4 1983009808
        %v882 = vunpack.c.0.s8 %v881
        %v883 = vlaneseq
        %v884 = vshrl.u32 %v883, 7
        %v885 = vsub.s32 %v882, %v884
        %v886 = vrot.slane %v879, %v885
        %v887 = vcombine.low %v810, %v826
        %v889 = vunpack.c.l.s4 1983009808
        %v890 = vunpack.c.0.s8 %v889
        %v891 = vlaneseq
        %v892 = vshrl.u32 %v891, 7
        %v893 = vsub.s32 %v890, %v892
        %v894 = vrot.slane %v887, %v893
        %v895 = vcombine.low %v886, %v894
        %v896 = vcombine.high %v886, %v894
        %v898 = vunpack.c.l.s4 1934713408
        %v899 = vunpack.c.0.s8 %v898
        %v900 = vlaneseq
        %v901 = vshrl.u32 %v900, 7
        %v902 = vsub.s32 %v899, %v901
        %v903 = vrot.slane %v895, %v902
        %v905 = vunpack.c.l.s4 1934713408
        %v906 = vunpack.c.0.s8 %v905
        %v907 = vlaneseq
        %v908 = vshrl.u32 %v907, 7
        %v909 = vsub.s32 %v906, %v908
        %v910 = vrot.slane %v896, %v909
        %v911 = vcombine.high %v903, 0
        %v912 = vcombine.high %v910, 0
        %v913 = vcombine.low %v800, %v816
        %v915 = vunpack.c.l.s4 1983009808
        %v916 = vunpack.c.0.s8 %v915
        %v917 = vlaneseq
        %v918 = vshrl.u32 %v917, 7
        %v919 = vsub.s32 %v916, %v918
        %v920 = vrot.slane %v913, %v919
        %v921 = vcombine.low %v808, %v824
        %v923 = vunpack.c.l.s4 1983009808
        %v924 = vunpack.c.0.s8 %v923
        %v925 = vlaneseq
        %v926 = vshrl.u32 %v925, 7
        %v927 = vsub.s32 %v924, %v926
        %v928 = vrot.slane %v921, %v927
        %v929 = vcombine.low %v920, %v928
        %v930 = vcombine.high %v920, %v928
        %v932 = vunpack.c.l.s4 1934713408
        %v933 = vunpack.c.0.s8 %v932
        %v934 = vlaneseq
        %v935 = vshrl.u32 %v934, 7
        %v936 = vsub.s32 %v933, %v935
        %v937 = vrot.slane %v929, %v936
        %v939 = vunpack.c.l.s4 1934713408
        %v940 = vunpack.c.0.s8 %v939
        %v941 = vlaneseq
        %v942 = vshrl.u32 %v941, 7
        %v943 = vsub.s32 %v940, %v942
        %v944 = vrot.slane %v930, %v943
        %v945 = vcombine.high %v937, 0
        %v946 = vcombine.high %v944, 0
        %v947 = vcombine.low %v804, %v820
        %v949 = vunpack.c.l.s4 1983009808
        %v950 = vunpack.c.0.s8 %v949
        %v951 = vlaneseq
        %v952 = vshrl.u32 %v951, 7
        %v953 = vsub.s32 %v950, %v952
        %v954 = vrot.slane %v947, %v953
        %v955 = vcombine.low %v812, %v828
        %v957 = vunpack.c.l.s4 1983009808
        %v958 = vunpack.c.0.s8 %v957
        %v959 = vlaneseq
        %v960 = vshrl.u32 %v959, 7
        %v961 = vsub.s32 %v958, %v960
        %v962 = vrot.slane %v955, %v961
        %v963 = vcombine.low %v954, %v962
        %v964 = vcombine.high %v954, %v962
        %v966 = vunpack.c.l.s4 1934713408
        %v967 = vunpack.c.0.s8 %v966
        %v968 = vlaneseq
        %v969 = vshrl.u32 %v968, 7
        %v970 = vsub.s32 %v967, %v969
        %v971 = vrot.slane %v963, %v970
        %v973 = vunpack.c.l.s4 1934713408
        %v974 = vunpack.c.0.s8 %v973
        %v975 = vlaneseq
        %v976 = vshrl.u32 %v975, 7
        %v977 = vsub.s32 %v974, %v976
        %v978 = vrot.slane %v964, %v977
        %v979 = vcombine.high %v971, 0
        %v980 = vcombine.high %v978, 0
        %v983 = vpack.i.b16 %v903, %v869
        %v984 = vshrl.u32 %v869, 16
        %v985 = vshrl.u32 %v903, 16
        %v986 = vpack.i.b16 %v985, %v984
        %v989 = vpack.i.b16 %v911, %v877
        %v990 = vshrl.u32 %v877, 16
        %v991 = vshrl.u32 %v911, 16
        %v992 = vpack.i.b16 %v991, %v990
        %v995 = vpack.i.b16 %v910, %v876
        %v996 = vshrl.u32 %v876, 16
        %v997 = vshrl.u32 %v910, 16
        %v998 = vpack.i.b16 %v997, %v996
        %v1001 = vpack.i.b16 %v912, %v878
        %v1002 = vshrl.u32 %v878, 16
        %v1003 = vshrl.u32 %v912, 16
        %v1004 = vpack.i.b16 %v1003, %v1002
        %v1007 = vpack.i.b16 %v971, %v937
        %v1008 = vshrl.u32 %v937, 16
        %v1009 = vshrl.u32 %v971, 16
        %v1010 = vpack.i.b16 %v1009, %v1008
        %v1013 = vpack.i.b16 %v979, %v945
        %v1014 = vshrl.u32 %v945, 16
        %v1015 = vshrl.u32 %v979, 16
        %v1016 = vpack.i.b16 %v1015, %v1014
        %v1019 = vpack.i.b16 %v978, %v944
        %v1020 = vshrl.u32 %v944, 16
        %v1021 = vshrl.u32 %v978, 16
        %v1022 = vpack.i.b16 %v1021, %v1020
        %v1025 = vpack.i.b16 %v980, %v946
        %v1026 = vshrl.u32 %v946, 16
        %v1027 = vshrl.u32 %v980, 16
        %v1028 = vpack.i.b16 %v1027, %v1026
        %v1029 = vunpack.c.l.b16 %v986
        %v1030 = vpack.c.b16 %v1029, %v1029
        %1031 = vrot.lane.b32.xlu0 %v1030, 16
        %v1032 = vpop.permute.xlu0 %1031
        %v1033 = vunpack.c.l.b16 %v989
        %v1034 = vpack.c.b16 %v1033, %v1033
        %1035 = vrot.lane.b32.xlu0 %v1034, 32
        %v1036 = vpop.permute.xlu0 %1035
        %v1037 = vunpack.c.l.b16 %v992
        %v1038 = vpack.c.b16 %v1037, %v1037
        %1039 = vrot.lane.b32.xlu0 %v1038, 48
        %v1040 = vpop.permute.xlu0 %1039
        %v1041 = vunpack.c.l.b16 %v995
        %v1042 = vpack.c.b16 %v1041, %v1041
        %1043 = vrot.lane.b32.xlu0 %v1042, 64
        %v1044 = vpop.permute.xlu0 %1043
        %v1045 = vunpack.c.l.b16 %v998
        %v1046 = vpack.c.b16 %v1045, %v1045
        %1047 = vrot.lane.b32.xlu0 %v1046, 80
        %v1048 = vpop.permute.xlu0 %1047
        %v1049 = vunpack.c.l.b16 %v1001
        %v1050 = vpack.c.b16 %v1049, %v1049
        %1051 = vrot.lane.b32.xlu0 %v1050, 96
        %v1052 = vpop.permute.xlu0 %1051
        %v1053 = vunpack.c.l.b16 %v1004
        %v1054 = vpack.c.b16 %v1053, %v1053
        %1055 = vrot.lane.b32.xlu0 %v1054, 112
        %v1056 = vpop.permute.xlu0 %1055
        %v1057 = vunpack.c.l.b16 %v1010
        %v1058 = vpack.c.b16 %v1057, %v1057
        %1059 = vrot.lane.b32.xlu0 %v1058, 16
        %v1060 = vpop.permute.xlu0 %1059
        %v1061 = vunpack.c.l.b16 %v1013
        %v1062 = vpack.c.b16 %v1061, %v1061
        %1063 = vrot.lane.b32.xlu0 %v1062, 32
        %v1064 = vpop.permute.xlu0 %1063
        %v1065 = vunpack.c.l.b16 %v1016
        %v1066 = vpack.c.b16 %v1065, %v1065
        %1067 = vrot.lane.b32.xlu0 %v1066, 48
        %v1068 = vpop.permute.xlu0 %1067
        %v1069 = vunpack.c.l.b16 %v1019
        %v1070 = vpack.c.b16 %v1069, %v1069
        %1071 = vrot.lane.b32.xlu0 %v1070, 64
        %v1072 = vpop.permute.xlu0 %1071
        %v1073 = vunpack.c.l.b16 %v1022
        %v1074 = vpack.c.b16 %v1073, %v1073
        %1075 = vrot.lane.b32.xlu0 %v1074, 80
        %v1076 = vpop.permute.xlu0 %1075
        %v1077 = vunpack.c.l.b16 %v1025
        %v1078 = vpack.c.b16 %v1077, %v1077
        %1079 = vrot.lane.b32.xlu0 %v1078, 96
        %v1080 = vpop.permute.xlu0 %1079
        %v1081 = vunpack.c.l.b16 %v1028
        %v1082 = vpack.c.b16 %v1081, %v1081
        %1083 = vrot.lane.b32.xlu0 %v1082, 112
        %v1084 = vpop.permute.xlu0 %1083
        %v1087 = vsel %vm426, %v983, %v1032
        %v1089 = vsel %vm430, %v1087, %v1036
        %v1091 = vsel %vm433, %v1089, %v1040
        %v1093 = vsel %vm436, %v1091, %v1044
        %v1095 = vsel %vm439, %v1093, %v1048
        %v1097 = vsel %vm442, %v1095, %v1052
        %v1099 = vsel %vm445, %v1097, %v1056
        %v1102 = vsel %vm426, %v1007, %v1060
        %v1104 = vsel %vm430, %v1102, %v1064
        %v1106 = vsel %vm433, %v1104, %v1068
        %v1108 = vsel %vm436, %v1106, %v1072
        %v1110 = vsel %vm439, %v1108, %v1076
        %v1112 = vsel %vm442, %v1110, %v1080
        %v1114 = vsel %vm445, %v1112, %v1084
        %v1115 = vld [vmem:[%s168 + $0x8] sm:$0x1]
        %v1116 = vld [vmem:[%s168 + $0x14] sm:$0x1]
        %v1117 = vld [vmem:[%s168 + $0x20] sm:$0x1]
        %v1118 = vld [vmem:[%s168 + $0x2c] sm:$0x1]
        %v1119 = vld [vmem:[%s168 + $0x38] sm:$0x1]
        %v1120 = vld [vmem:[%s168 + $0x44] sm:$0x1]
        %v1121 = vld [vmem:[%s168 + $0x50] sm:$0x1]
        %v1122 = vld [vmem:[%s168 + $0x5c] sm:$0x1]
        %vm1123 = vsmask.f32 3328
        %vm1124 = vsmask.f32 7440
        %vm1125 = vmor %vm1123, %vm1124
        %v1127 = vshrl.u32 %v170, 16
        %v1129 = vrot.slane %v1127, 4
        %v1130 = vshll.u32 %v170, 16
        %v1132 = vrot.slane %v1130, 5
        %v1133 = vor.u32 %v1129, %v1132
        %v1134 = vrot.slane %v1133, 4
        %v1136 = vshll.u32 %v171, 16
        %v1138 = vrot.slane %v1136, 5
        %v1139 = vsel %vm1125, %v1134, %v1138
        %v1140 = vshrl.u32 %v171, 16
        %v1142 = vrot.slane %v1140, 4
        %v1143 = vor.u32 %v1142, %v1138
        %v1144 = vrot.slane %v1143, 4
        %v1146 = vshll.u32 %v1115, 16
        %v1148 = vrot.slane %v1146, 5
        %v1149 = vsel %vm1125, %v1144, %v1148
        %v1151 = vshrl.u32 %v172, 16
        %v1153 = vrot.slane %v1151, 4
        %v1154 = vshll.u32 %v172, 16
        %v1156 = vrot.slane %v1154, 5
        %v1157 = vor.u32 %v1153, %v1156
        %v1158 = vrot.slane %v1157, 4
        %v1160 = vshll.u32 %v173, 16
        %v1162 = vrot.slane %v1160, 5
        %v1163 = vsel %vm1125, %v1158, %v1162
        %v1164 = vshrl.u32 %v173, 16
        %v1166 = vrot.slane %v1164, 4
        %v1167 = vor.u32 %v1166, %v1162
        %v1168 = vrot.slane %v1167, 4
        %v1170 = vshll.u32 %v1116, 16
        %v1172 = vrot.slane %v1170, 5
        %v1173 = vsel %vm1125, %v1168, %v1172
        %v1175 = vshrl.u32 %v174, 16
        %v1177 = vrot.slane %v1175, 4
        %v1178 = vshll.u32 %v174, 16
        %v1180 = vrot.slane %v1178, 5
        %v1181 = vor.u32 %v1177, %v1180
        %v1182 = vrot.slane %v1181, 4
        %v1184 = vshll.u32 %v175, 16
        %v1186 = vrot.slane %v1184, 5
        %v1187 = vsel %vm1125, %v1182, %v1186
        %v1188 = vshrl.u32 %v175, 16
        %v1190 = vrot.slane %v1188, 4
        %v1191 = vor.u32 %v1190, %v1186
        %v1192 = vrot.slane %v1191, 4
        %v1194 = vshll.u32 %v1117, 16
        %v1196 = vrot.slane %v1194, 5
        %v1197 = vsel %vm1125, %v1192, %v1196
        %v1199 = vshrl.u32 %v176, 16
        %v1201 = vrot.slane %v1199, 4
        %v1202 = vshll.u32 %v176, 16
        %v1204 = vrot.slane %v1202, 5
        %v1205 = vor.u32 %v1201, %v1204
        %v1206 = vrot.slane %v1205, 4
        %v1208 = vshll.u32 %v177, 16
        %v1210 = vrot.slane %v1208, 5
        %v1211 = vsel %vm1125, %v1206, %v1210
        %v1212 = vshrl.u32 %v177, 16
        %v1214 = vrot.slane %v1212, 4
        %v1215 = vor.u32 %v1214, %v1210
        %v1216 = vrot.slane %v1215, 4
        %v1218 = vshll.u32 %v1118, 16
        %v1220 = vrot.slane %v1218, 5
        %v1221 = vsel %vm1125, %v1216, %v1220
        %v1223 = vshrl.u32 %v178, 16
        %v1225 = vrot.slane %v1223, 4
        %v1226 = vshll.u32 %v178, 16
        %v1228 = vrot.slane %v1226, 5
        %v1229 = vor.u32 %v1225, %v1228
        %v1230 = vrot.slane %v1229, 4
        %v1232 = vshll.u32 %v179, 16
        %v1234 = vrot.slane %v1232, 5
        %v1235 = vsel %vm1125, %v1230, %v1234
        %v1236 = vshrl.u32 %v179, 16
        %v1238 = vrot.slane %v1236, 4
        %v1239 = vor.u32 %v1238, %v1234
        %v1240 = vrot.slane %v1239, 4
        %v1242 = vshll.u32 %v1119, 16
        %v1244 = vrot.slane %v1242, 5
        %v1245 = vsel %vm1125, %v1240, %v1244
        %v1247 = vshrl.u32 %v180, 16
        %v1249 = vrot.slane %v1247, 4
        %v1250 = vshll.u32 %v180, 16
        %v1252 = vrot.slane %v1250, 5
        %v1253 = vor.u32 %v1249, %v1252
        %v1254 = vrot.slane %v1253, 4
        %v1256 = vshll.u32 %v181, 16
        %v1258 = vrot.slane %v1256, 5
        %v1259 = vsel %vm1125, %v1254, %v1258
        %v1260 = vshrl.u32 %v181, 16
        %v1262 = vrot.slane %v1260, 4
        %v1263 = vor.u32 %v1262, %v1258
        %v1264 = vrot.slane %v1263, 4
        %v1266 = vshll.u32 %v1120, 16
        %v1268 = vrot.slane %v1266, 5
        %v1269 = vsel %vm1125, %v1264, %v1268
        %v1271 = vshrl.u32 %v182, 16
        %v1273 = vrot.slane %v1271, 4
        %v1274 = vshll.u32 %v182, 16
        %v1276 = vrot.slane %v1274, 5
        %v1277 = vor.u32 %v1273, %v1276
        %v1278 = vrot.slane %v1277, 4
        %v1280 = vshll.u32 %v183, 16
        %v1282 = vrot.slane %v1280, 5
        %v1283 = vsel %vm1125, %v1278, %v1282
        %v1284 = vshrl.u32 %v183, 16
        %v1286 = vrot.slane %v1284, 4
        %v1287 = vor.u32 %v1286, %v1282
        %v1288 = vrot.slane %v1287, 4
        %v1290 = vshll.u32 %v1121, 16
        %v1292 = vrot.slane %v1290, 5
        %v1293 = vsel %vm1125, %v1288, %v1292
        %v1295 = vshrl.u32 %v184, 16
        %v1297 = vrot.slane %v1295, 4
        %v1298 = vshll.u32 %v184, 16
        %v1300 = vrot.slane %v1298, 5
        %v1301 = vor.u32 %v1297, %v1300
        %v1302 = vrot.slane %v1301, 4
        %v1304 = vshll.u32 %v185, 16
        %v1306 = vrot.slane %v1304, 5
        %v1307 = vsel %vm1125, %v1302, %v1306
        %v1308 = vshrl.u32 %v185, 16
        %v1310 = vrot.slane %v1308, 4
        %v1311 = vor.u32 %v1310, %v1306
        %v1312 = vrot.slane %v1311, 4
        %v1314 = vshll.u32 %v1122, 16
        %v1316 = vrot.slane %v1314, 5
        %v1317 = vsel %vm1125, %v1312, %v1316
        %v1334 = vcombine.low %v1139, %v1235
        %v1336 = vunpack.c.l.s4 1983009808
        %v1337 = vunpack.c.0.s8 %v1336
        %v1338 = vlaneseq
        %v1339 = vshrl.u32 %v1338, 7
        %v1340 = vsub.s32 %v1337, %v1339
        %v1341 = vrot.slane %v1334, %v1340
        %v1342 = vcombine.low %v1187, %v1283
        %v1344 = vunpack.c.l.s4 1983009808
        %v1345 = vunpack.c.0.s8 %v1344
        %v1346 = vlaneseq
        %v1347 = vshrl.u32 %v1346, 7
        %v1348 = vsub.s32 %v1345, %v1347
        %v1349 = vrot.slane %v1342, %v1348
        %v1350 = vcombine.low %v1341, %v1349
        %v1351 = vcombine.high %v1341, %v1349
        %v1353 = vunpack.c.l.s4 1934713408
        %v1354 = vunpack.c.0.s8 %v1353
        %v1355 = vlaneseq
        %v1356 = vshrl.u32 %v1355, 7
        %v1357 = vsub.s32 %v1354, %v1356
        %v1358 = vrot.slane %v1350, %v1357
        %v1360 = vunpack.c.l.s4 1934713408
        %v1361 = vunpack.c.0.s8 %v1360
        %v1362 = vlaneseq
        %v1363 = vshrl.u32 %v1362, 7
        %v1364 = vsub.s32 %v1361, %v1363
        %v1365 = vrot.slane %v1351, %v1364
        %v1366 = vcombine.high %v1358, 0
        %v1367 = vcombine.high %v1365, 0
        %v1368 = vcombine.low %v1163, %v1259
        %v1370 = vunpack.c.l.s4 1983009808
        %v1371 = vunpack.c.0.s8 %v1370
        %v1372 = vlaneseq
        %v1373 = vshrl.u32 %v1372, 7
        %v1374 = vsub.s32 %v1371, %v1373
        %v1375 = vrot.slane %v1368, %v1374
        %v1376 = vcombine.low %v1211, %v1307
        %v1378 = vunpack.c.l.s4 1983009808
        %v1379 = vunpack.c.0.s8 %v1378
        %v1380 = vlaneseq
        %v1381 = vshrl.u32 %v1380, 7
        %v1382 = vsub.s32 %v1379, %v1381
        %v1383 = vrot.slane %v1376, %v1382
        %v1384 = vcombine.low %v1375, %v1383
        %v1385 = vcombine.high %v1375, %v1383
        %v1387 = vunpack.c.l.s4 1934713408
        %v1388 = vunpack.c.0.s8 %v1387
        %v1389 = vlaneseq
        %v1390 = vshrl.u32 %v1389, 7
        %v1391 = vsub.s32 %v1388, %v1390
        %v1392 = vrot.slane %v1384, %v1391
        %v1394 = vunpack.c.l.s4 1934713408
        %v1395 = vunpack.c.0.s8 %v1394
        %v1396 = vlaneseq
        %v1397 = vshrl.u32 %v1396, 7
        %v1398 = vsub.s32 %v1395, %v1397
        %v1399 = vrot.slane %v1385, %v1398
        %v1400 = vcombine.high %v1392, 0
        %v1401 = vcombine.high %v1399, 0
        %v1402 = vcombine.low %v1149, %v1245
        %v1404 = vunpack.c.l.s4 1983009808
        %v1405 = vunpack.c.0.s8 %v1404
        %v1406 = vlaneseq
        %v1407 = vshrl.u32 %v1406, 7
        %v1408 = vsub.s32 %v1405, %v1407
        %v1409 = vrot.slane %v1402, %v1408
        %v1410 = vcombine.low %v1197, %v1293
        %v1412 = vunpack.c.l.s4 1983009808
        %v1413 = vunpack.c.0.s8 %v1412
        %v1414 = vlaneseq
        %v1415 = vshrl.u32 %v1414, 7
        %v1416 = vsub.s32 %v1413, %v1415
        %v1417 = vrot.slane %v1410, %v1416
        %v1418 = vcombine.low %v1409, %v1417
        %v1419 = vcombine.high %v1409, %v1417
        %v1421 = vunpack.c.l.s4 1934713408
        %v1422 = vunpack.c.0.s8 %v1421
        %v1423 = vlaneseq
        %v1424 = vshrl.u32 %v1423, 7
        %v1425 = vsub.s32 %v1422, %v1424
        %v1426 = vrot.slane %v1418, %v1425
        %v1428 = vunpack.c.l.s4 1934713408
        %v1429 = vunpack.c.0.s8 %v1428
        %v1430 = vlaneseq
        %v1431 = vshrl.u32 %v1430, 7
        %v1432 = vsub.s32 %v1429, %v1431
        %v1433 = vrot.slane %v1419, %v1432
        %v1434 = vcombine.high %v1426, 0
        %v1435 = vcombine.high %v1433, 0
        %v1436 = vcombine.low %v1173, %v1269
        %v1438 = vunpack.c.l.s4 1983009808
        %v1439 = vunpack.c.0.s8 %v1438
        %v1440 = vlaneseq
        %v1441 = vshrl.u32 %v1440, 7
        %v1442 = vsub.s32 %v1439, %v1441
        %v1443 = vrot.slane %v1436, %v1442
        %v1444 = vcombine.low %v1221, %v1317
        %v1446 = vunpack.c.l.s4 1983009808
        %v1447 = vunpack.c.0.s8 %v1446
        %v1448 = vlaneseq
        %v1449 = vshrl.u32 %v1448, 7
        %v1450 = vsub.s32 %v1447, %v1449
        %v1451 = vrot.slane %v1444, %v1450
        %v1452 = vcombine.low %v1443, %v1451
        %v1453 = vcombine.high %v1443, %v1451
        %v1455 = vunpack.c.l.s4 1934713408
        %v1456 = vunpack.c.0.s8 %v1455
        %v1457 = vlaneseq
        %v1458 = vshrl.u32 %v1457, 7
        %v1459 = vsub.s32 %v1456, %v1458
        %v1460 = vrot.slane %v1452, %v1459
        %v1462 = vunpack.c.l.s4 1934713408
        %v1463 = vunpack.c.0.s8 %v1462
        %v1464 = vlaneseq
        %v1465 = vshrl.u32 %v1464, 7
        %v1466 = vsub.s32 %v1463, %v1465
        %v1467 = vrot.slane %v1453, %v1466
        %v1468 = vcombine.high %v1460, 0
        %v1469 = vcombine.high %v1467, 0
        %v1472 = vpack.i.b16 %v1392, %v1358
        %v1473 = vshrl.u32 %v1358, 16
        %v1474 = vshrl.u32 %v1392, 16
        %v1475 = vpack.i.b16 %v1474, %v1473
        %v1478 = vpack.i.b16 %v1400, %v1366
        %v1479 = vshrl.u32 %v1366, 16
        %v1480 = vshrl.u32 %v1400, 16
        %v1481 = vpack.i.b16 %v1480, %v1479
        %v1484 = vpack.i.b16 %v1399, %v1365
        %v1485 = vshrl.u32 %v1365, 16
        %v1486 = vshrl.u32 %v1399, 16
        %v1487 = vpack.i.b16 %v1486, %v1485
        %v1490 = vpack.i.b16 %v1401, %v1367
        %v1491 = vshrl.u32 %v1367, 16
        %v1492 = vshrl.u32 %v1401, 16
        %v1493 = vpack.i.b16 %v1492, %v1491
        %v1496 = vpack.i.b16 %v1460, %v1426
        %v1497 = vshrl.u32 %v1426, 16
        %v1498 = vshrl.u32 %v1460, 16
        %v1499 = vpack.i.b16 %v1498, %v1497
        %v1502 = vpack.i.b16 %v1468, %v1434
        %v1503 = vshrl.u32 %v1434, 16
        %v1504 = vshrl.u32 %v1468, 16
        %v1505 = vpack.i.b16 %v1504, %v1503
        %v1508 = vpack.i.b16 %v1467, %v1433
        %v1509 = vshrl.u32 %v1433, 16
        %v1510 = vshrl.u32 %v1467, 16
        %v1511 = vpack.i.b16 %v1510, %v1509
        %v1514 = vpack.i.b16 %v1469, %v1435
        %v1515 = vshrl.u32 %v1435, 16
        %v1516 = vshrl.u32 %v1469, 16
        %v1517 = vpack.i.b16 %v1516, %v1515
        %v1518 = vunpack.c.l.b16 %v1475
        %v1519 = vpack.c.b16 %v1518, %v1518
        %1520 = vrot.lane.b32.xlu0 %v1519, 16
        %v1521 = vpop.permute.xlu0 %1520
        %v1522 = vunpack.c.l.b16 %v1478
        %v1523 = vpack.c.b16 %v1522, %v1522
        %1524 = vrot.lane.b32.xlu0 %v1523, 32
        %v1525 = vpop.permute.xlu0 %1524
        %v1526 = vunpack.c.l.b16 %v1481
        %v1527 = vpack.c.b16 %v1526, %v1526
        %1528 = vrot.lane.b32.xlu0 %v1527, 48
        %v1529 = vpop.permute.xlu0 %1528
        %v1530 = vunpack.c.l.b16 %v1484
        %v1531 = vpack.c.b16 %v1530, %v1530
        %1532 = vrot.lane.b32.xlu0 %v1531, 64
        %v1533 = vpop.permute.xlu0 %1532
        %v1534 = vunpack.c.l.b16 %v1487
        %v1535 = vpack.c.b16 %v1534, %v1534
        %1536 = vrot.lane.b32.xlu0 %v1535, 80
        %v1537 = vpop.permute.xlu0 %1536
        %v1538 = vunpack.c.l.b16 %v1490
        %v1539 = vpack.c.b16 %v1538, %v1538
        %1540 = vrot.lane.b32.xlu0 %v1539, 96
        %v1541 = vpop.permute.xlu0 %1540
        %v1542 = vunpack.c.l.b16 %v1493
        %v1543 = vpack.c.b16 %v1542, %v1542
        %1544 = vrot.lane.b32.xlu0 %v1543, 112
        %v1545 = vpop.permute.xlu0 %1544
        %v1546 = vunpack.c.l.b16 %v1499
        %v1547 = vpack.c.b16 %v1546, %v1546
        %1548 = vrot.lane.b32.xlu0 %v1547, 16
        %v1549 = vpop.permute.xlu0 %1548
        %v1550 = vunpack.c.l.b16 %v1502
        %v1551 = vpack.c.b16 %v1550, %v1550
        %1552 = vrot.lane.b32.xlu0 %v1551, 32
        %v1553 = vpop.permute.xlu0 %1552
        %v1554 = vunpack.c.l.b16 %v1505
        %v1555 = vpack.c.b16 %v1554, %v1554
        %1556 = vrot.lane.b32.xlu0 %v1555, 48
        %v1557 = vpop.permute.xlu0 %1556
        %v1558 = vunpack.c.l.b16 %v1508
        %v1559 = vpack.c.b16 %v1558, %v1558
        %1560 = vrot.lane.b32.xlu0 %v1559, 64
        %v1561 = vpop.permute.xlu0 %1560
        %v1562 = vunpack.c.l.b16 %v1511
        %v1563 = vpack.c.b16 %v1562, %v1562
        %1564 = vrot.lane.b32.xlu0 %v1563, 80
        %v1565 = vpop.permute.xlu0 %1564
        %v1566 = vunpack.c.l.b16 %v1514
        %v1567 = vpack.c.b16 %v1566, %v1566
        %1568 = vrot.lane.b32.xlu0 %v1567, 96
        %v1569 = vpop.permute.xlu0 %1568
        %v1570 = vunpack.c.l.b16 %v1517
        %v1571 = vpack.c.b16 %v1570, %v1570
        %1572 = vrot.lane.b32.xlu0 %v1571, 112
        %v1573 = vpop.permute.xlu0 %1572
        %v1576 = vsel %vm426, %v1472, %v1521
        %v1578 = vsel %vm430, %v1576, %v1525
        %v1580 = vsel %vm433, %v1578, %v1529
        %v1582 = vsel %vm436, %v1580, %v1533
        %v1584 = vsel %vm439, %v1582, %v1537
        %v1586 = vsel %vm442, %v1584, %v1541
        %v1588 = vsel %vm445, %v1586, %v1545
        %v1591 = vsel %vm426, %v1496, %v1549
        %v1593 = vsel %vm430, %v1591, %v1553
        %v1595 = vsel %vm433, %v1593, %v1557
        %v1597 = vsel %vm436, %v1595, %v1561
        %v1599 = vsel %vm439, %v1597, %v1565
        %v1601 = vsel %vm442, %v1599, %v1569
        %v1603 = vsel %vm445, %v1601, %v1573
        %1604 = vrot.lane.b32.xlu0 %v1139, 127
        %v1605 = vpop.permute.xlu0 %1604
        %1606 = vrot.lane.b32.xlu0 %v1149, 127
        %v1607 = vpop.permute.xlu0 %1606
        %1608 = vrot.lane.b32.xlu0 %v1163, 127
        %v1609 = vpop.permute.xlu0 %1608
        %1610 = vrot.lane.b32.xlu0 %v1173, 127
        %v1611 = vpop.permute.xlu0 %1610
        %1612 = vrot.lane.b32.xlu0 %v1187, 127
        %v1613 = vpop.permute.xlu0 %1612
        %1614 = vrot.lane.b32.xlu0 %v1197, 127
        %v1615 = vpop.permute.xlu0 %1614
        %1616 = vrot.lane.b32.xlu0 %v1211, 127
        %v1617 = vpop.permute.xlu0 %1616
        %1618 = vrot.lane.b32.xlu0 %v1221, 127
        %v1619 = vpop.permute.xlu0 %1618
        %1620 = vrot.lane.b32.xlu0 %v1235, 127
        %v1621 = vpop.permute.xlu0 %1620
        %1622 = vrot.lane.b32.xlu0 %v1245, 127
        %v1623 = vpop.permute.xlu0 %1622
        %1624 = vrot.lane.b32.xlu0 %v1259, 127
        %v1625 = vpop.permute.xlu0 %1624
        %1626 = vrot.lane.b32.xlu0 %v1269, 127
        %v1627 = vpop.permute.xlu0 %1626
        %1628 = vrot.lane.b32.xlu0 %v1283, 127
        %v1629 = vpop.permute.xlu0 %1628
        %1630 = vrot.lane.b32.xlu0 %v1293, 127
        %v1631 = vpop.permute.xlu0 %1630
        %1632 = vrot.lane.b32.xlu0 %v1307, 127
        %v1633 = vpop.permute.xlu0 %1632
        %1634 = vrot.lane.b32.xlu0 %v1317, 127
        %v1635 = vpop.permute.xlu0 %1634
        %v1652 = vcombine.low %v1605, %v1621
        %v1654 = vunpack.c.l.s4 1983009808
        %v1655 = vunpack.c.0.s8 %v1654
        %v1656 = vlaneseq
        %v1657 = vshrl.u32 %v1656, 7
        %v1658 = vsub.s32 %v1655, %v1657
        %v1659 = vrot.slane %v1652, %v1658
        %v1660 = vcombine.low %v1613, %v1629
        %v1662 = vunpack.c.l.s4 1983009808
        %v1663 = vunpack.c.0.s8 %v1662
        %v1664 = vlaneseq
        %v1665 = vshrl.u32 %v1664, 7
        %v1666 = vsub.s32 %v1663, %v1665
        %v1667 = vrot.slane %v1660, %v1666
        %v1668 = vcombine.low %v1659, %v1667
        %v1669 = vcombine.high %v1659, %v1667
        %v1671 = vunpack.c.l.s4 1934713408
        %v1672 = vunpack.c.0.s8 %v1671
        %v1673 = vlaneseq
        %v1674 = vshrl.u32 %v1673, 7
        %v1675 = vsub.s32 %v1672, %v1674
        %v1676 = vrot.slane %v1668, %v1675
        %v1678 = vunpack.c.l.s4 1934713408
        %v1679 = vunpack.c.0.s8 %v1678
        %v1680 = vlaneseq
        %v1681 = vshrl.u32 %v1680, 7
        %v1682 = vsub.s32 %v1679, %v1681
        %v1683 = vrot.slane %v1669, %v1682
        %v1684 = vcombine.high %v1676, 0
        %v1685 = vcombine.high %v1683, 0
        %v1686 = vcombine.low %v1609, %v1625
        %v1688 = vunpack.c.l.s4 1983009808
        %v1689 = vunpack.c.0.s8 %v1688
        %v1690 = vlaneseq
        %v1691 = vshrl.u32 %v1690, 7
        %v1692 = vsub.s32 %v1689, %v1691
        %v1693 = vrot.slane %v1686, %v1692
        %v1694 = vcombine.low %v1617, %v1633
        %v1696 = vunpack.c.l.s4 1983009808
        %v1697 = vunpack.c.0.s8 %v1696
        %v1698 = vlaneseq
        %v1699 = vshrl.u32 %v1698, 7
        %v1700 = vsub.s32 %v1697, %v1699
        %v1701 = vrot.slane %v1694, %v1700
        %v1702 = vcombine.low %v1693, %v1701
        %v1703 = vcombine.high %v1693, %v1701
        %v1705 = vunpack.c.l.s4 1934713408
        %v1706 = vunpack.c.0.s8 %v1705
        %v1707 = vlaneseq
        %v1708 = vshrl.u32 %v1707, 7
        %v1709 = vsub.s32 %v1706, %v1708
        %v1710 = vrot.slane %v1702, %v1709
        %v1712 = vunpack.c.l.s4 1934713408
        %v1713 = vunpack.c.0.s8 %v1712
        %v1714 = vlaneseq
        %v1715 = vshrl.u32 %v1714, 7
        %v1716 = vsub.s32 %v1713, %v1715
        %v1717 = vrot.slane %v1703, %v1716
        %v1718 = vcombine.high %v1710, 0
        %v1719 = vcombine.high %v1717, 0
        %v1720 = vcombine.low %v1607, %v1623
        %v1722 = vunpack.c.l.s4 1983009808
        %v1723 = vunpack.c.0.s8 %v1722
        %v1724 = vlaneseq
        %v1725 = vshrl.u32 %v1724, 7
        %v1726 = vsub.s32 %v1723, %v1725
        %v1727 = vrot.slane %v1720, %v1726
        %v1728 = vcombine.low %v1615, %v1631
        %v1730 = vunpack.c.l.s4 1983009808
        %v1731 = vunpack.c.0.s8 %v1730
        %v1732 = vlaneseq
        %v1733 = vshrl.u32 %v1732, 7
        %v1734 = vsub.s32 %v1731, %v1733
        %v1735 = vrot.slane %v1728, %v1734
        %v1736 = vcombine.low %v1727, %v1735
        %v1737 = vcombine.high %v1727, %v1735
        %v1739 = vunpack.c.l.s4 1934713408
        %v1740 = vunpack.c.0.s8 %v1739
        %v1741 = vlaneseq
        %v1742 = vshrl.u32 %v1741, 7
        %v1743 = vsub.s32 %v1740, %v1742
        %v1744 = vrot.slane %v1736, %v1743
        %v1746 = vunpack.c.l.s4 1934713408
        %v1747 = vunpack.c.0.s8 %v1746
        %v1748 = vlaneseq
        %v1749 = vshrl.u32 %v1748, 7
        %v1750 = vsub.s32 %v1747, %v1749
        %v1751 = vrot.slane %v1737, %v1750
        %v1752 = vcombine.high %v1744, 0
        %v1753 = vcombine.high %v1751, 0
        %v1754 = vcombine.low %v1611, %v1627
        %v1756 = vunpack.c.l.s4 1983009808
        %v1757 = vunpack.c.0.s8 %v1756
        %v1758 = vlaneseq
        %v1759 = vshrl.u32 %v1758, 7
        %v1760 = vsub.s32 %v1757, %v1759
        %v1761 = vrot.slane %v1754, %v1760
        %v1762 = vcombine.low %v1619, %v1635
        %v1764 = vunpack.c.l.s4 1983009808
        %v1765 = vunpack.c.0.s8 %v1764
        %v1766 = vlaneseq
        %v1767 = vshrl.u32 %v1766, 7
        %v1768 = vsub.s32 %v1765, %v1767
        %v1769 = vrot.slane %v1762, %v1768
        %v1770 = vcombine.low %v1761, %v1769
        %v1771 = vcombine.high %v1761, %v1769
        %v1773 = vunpack.c.l.s4 1934713408
        %v1774 = vunpack.c.0.s8 %v1773
        %v1775 = vlaneseq
        %v1776 = vshrl.u32 %v1775, 7
        %v1777 = vsub.s32 %v1774, %v1776
        %v1778 = vrot.slane %v1770, %v1777
        %v1780 = vunpack.c.l.s4 1934713408
        %v1781 = vunpack.c.0.s8 %v1780
        %v1782 = vlaneseq
        %v1783 = vshrl.u32 %v1782, 7
        %v1784 = vsub.s32 %v1781, %v1783
        %v1785 = vrot.slane %v1771, %v1784
        %v1786 = vcombine.high %v1778, 0
        %v1787 = vcombine.high %v1785, 0
        %v1790 = vpack.i.b16 %v1710, %v1676
        %v1791 = vshrl.u32 %v1676, 16
        %v1792 = vshrl.u32 %v1710, 16
        %v1793 = vpack.i.b16 %v1792, %v1791
        %v1796 = vpack.i.b16 %v1718, %v1684
        %v1797 = vshrl.u32 %v1684, 16
        %v1798 = vshrl.u32 %v1718, 16
        %v1799 = vpack.i.b16 %v1798, %v1797
        %v1802 = vpack.i.b16 %v1717, %v1683
        %v1803 = vshrl.u32 %v1683, 16
        %v1804 = vshrl.u32 %v1717, 16
        %v1805 = vpack.i.b16 %v1804, %v1803
        %v1808 = vpack.i.b16 %v1719, %v1685
        %v1809 = vshrl.u32 %v1685, 16
        %v1810 = vshrl.u32 %v1719, 16
        %v1811 = vpack.i.b16 %v1810, %v1809
        %v1814 = vpack.i.b16 %v1778, %v1744
        %v1815 = vshrl.u32 %v1744, 16
        %v1816 = vshrl.u32 %v1778, 16
        %v1817 = vpack.i.b16 %v1816, %v1815
        %v1820 = vpack.i.b16 %v1786, %v1752
        %v1821 = vshrl.u32 %v1752, 16
        %v1822 = vshrl.u32 %v1786, 16
        %v1823 = vpack.i.b16 %v1822, %v1821
        %v1826 = vpack.i.b16 %v1785, %v1751
        %v1827 = vshrl.u32 %v1751, 16
        %v1828 = vshrl.u32 %v1785, 16
        %v1829 = vpack.i.b16 %v1828, %v1827
        %v1832 = vpack.i.b16 %v1787, %v1753
        %v1833 = vshrl.u32 %v1753, 16
        %v1834 = vshrl.u32 %v1787, 16
        %v1835 = vpack.i.b16 %v1834, %v1833
        %v1836 = vunpack.c.l.b16 %v1793
        %v1837 = vpack.c.b16 %v1836, %v1836
        %1838 = vrot.lane.b32.xlu0 %v1837, 16
        %v1839 = vpop.permute.xlu0 %1838
        %v1840 = vunpack.c.l.b16 %v1796
        %v1841 = vpack.c.b16 %v1840, %v1840
        %1842 = vrot.lane.b32.xlu0 %v1841, 32
        %v1843 = vpop.permute.xlu0 %1842
        %v1844 = vunpack.c.l.b16 %v1799
        %v1845 = vpack.c.b16 %v1844, %v1844
        %1846 = vrot.lane.b32.xlu0 %v1845, 48
        %v1847 = vpop.permute.xlu0 %1846
        %v1848 = vunpack.c.l.b16 %v1802
        %v1849 = vpack.c.b16 %v1848, %v1848
        %1850 = vrot.lane.b32.xlu0 %v1849, 64
        %v1851 = vpop.permute.xlu0 %1850
        %v1852 = vunpack.c.l.b16 %v1805
        %v1853 = vpack.c.b16 %v1852, %v1852
        %1854 = vrot.lane.b32.xlu0 %v1853, 80
        %v1855 = vpop.permute.xlu0 %1854
        %v1856 = vunpack.c.l.b16 %v1808
        %v1857 = vpack.c.b16 %v1856, %v1856
        %1858 = vrot.lane.b32.xlu0 %v1857, 96
        %v1859 = vpop.permute.xlu0 %1858
        %v1860 = vunpack.c.l.b16 %v1811
        %v1861 = vpack.c.b16 %v1860, %v1860
        %1862 = vrot.lane.b32.xlu0 %v1861, 112
        %v1863 = vpop.permute.xlu0 %1862
        %v1864 = vunpack.c.l.b16 %v1817
        %v1865 = vpack.c.b16 %v1864, %v1864
        %1866 = vrot.lane.b32.xlu0 %v1865, 16
        %v1867 = vpop.permute.xlu0 %1866
        %v1868 = vunpack.c.l.b16 %v1820
        %v1869 = vpack.c.b16 %v1868, %v1868
        %1870 = vrot.lane.b32.xlu0 %v1869, 32
        %v1871 = vpop.permute.xlu0 %1870
        %v1872 = vunpack.c.l.b16 %v1823
        %v1873 = vpack.c.b16 %v1872, %v1872
        %1874 = vrot.lane.b32.xlu0 %v1873, 48
        %v1875 = vpop.permute.xlu0 %1874
        %v1876 = vunpack.c.l.b16 %v1826
        %v1877 = vpack.c.b16 %v1876, %v1876
        %1878 = vrot.lane.b32.xlu0 %v1877, 64
        %v1879 = vpop.permute.xlu0 %1878
        %v1880 = vunpack.c.l.b16 %v1829
        %v1881 = vpack.c.b16 %v1880, %v1880
        %1882 = vrot.lane.b32.xlu0 %v1881, 80
        %v1883 = vpop.permute.xlu0 %1882
        %v1884 = vunpack.c.l.b16 %v1832
        %v1885 = vpack.c.b16 %v1884, %v1884
        %1886 = vrot.lane.b32.xlu0 %v1885, 96
        %v1887 = vpop.permute.xlu0 %1886
        %v1888 = vunpack.c.l.b16 %v1835
        %v1889 = vpack.c.b16 %v1888, %v1888
        %1890 = vrot.lane.b32.xlu0 %v1889, 112
        %v1891 = vpop.permute.xlu0 %1890
        %v1894 = vsel %vm426, %v1790, %v1839
        %v1896 = vsel %vm430, %v1894, %v1843
        %v1898 = vsel %vm433, %v1896, %v1847
        %v1900 = vsel %vm436, %v1898, %v1851
        %v1902 = vsel %vm439, %v1900, %v1855
        %v1904 = vsel %vm442, %v1902, %v1859
        %v1906 = vsel %vm445, %v1904, %v1863
        %v1909 = vsel %vm426, %v1814, %v1867
        %v1911 = vsel %vm430, %v1909, %v1871
        %v1913 = vsel %vm433, %v1911, %v1875
        %v1915 = vsel %vm436, %v1913, %v1879
        %v1917 = vsel %vm439, %v1915, %v1883
        %v1919 = vsel %vm442, %v1917, %v1887
        %v1921 = vsel %vm445, %v1919, %v1891
        %1922 = vrot.lane.b32.xlu0 %v1139, 126
        %v1923 = vpop.permute.xlu0 %1922
        %1924 = vrot.lane.b32.xlu0 %v1149, 126
        %v1925 = vpop.permute.xlu0 %1924
        %1926 = vrot.lane.b32.xlu0 %v1163, 126
        %v1927 = vpop.permute.xlu0 %1926
        %1928 = vrot.lane.b32.xlu0 %v1173, 126
        %v1929 = vpop.permute.xlu0 %1928
        %1930 = vrot.lane.b32.xlu0 %v1187, 126
        %v1931 = vpop.permute.xlu0 %1930
        %1932 = vrot.lane.b32.xlu0 %v1197, 126
        %v1933 = vpop.permute.xlu0 %1932
        %1934 = vrot.lane.b32.xlu0 %v1211, 126
        %v1935 = vpop.permute.xlu0 %1934
        %1936 = vrot.lane.b32.xlu0 %v1221, 126
        %v1937 = vpop.permute.xlu0 %1936
        %1938 = vrot.lane.b32.xlu0 %v1235, 126
        %v1939 = vpop.permute.xlu0 %1938
        %1940 = vrot.lane.b32.xlu0 %v1245, 126
        %v1941 = vpop.permute.xlu0 %1940
        %1942 = vrot.lane.b32.xlu0 %v1259, 126
        %v1943 = vpop.permute.xlu0 %1942
        %1944 = vrot.lane.b32.xlu0 %v1269, 126
        %v1945 = vpop.permute.xlu0 %1944
        %1946 = vrot.lane.b32.xlu0 %v1283, 126
        %v1947 = vpop.permute.xlu0 %1946
        %1948 = vrot.lane.b32.xlu0 %v1293, 126
        %v1949 = vpop.permute.xlu0 %1948
        %1950 = vrot.lane.b32.xlu0 %v1307, 126
        %v1951 = vpop.permute.xlu0 %1950
        %1952 = vrot.lane.b32.xlu0 %v1317, 126
        %v1953 = vpop.permute.xlu0 %1952
        %v1970 = vcombine.low %v1923, %v1939
        %v1972 = vunpack.c.l.s4 1983009808
        %v1973 = vunpack.c.0.s8 %v1972
        %v1974 = vlaneseq
        %v1975 = vshrl.u32 %v1974, 7
        %v1976 = vsub.s32 %v1973, %v1975
        %v1977 = vrot.slane %v1970, %v1976
        %v1978 = vcombine.low %v1931, %v1947
        %v1980 = vunpack.c.l.s4 1983009808
        %v1981 = vunpack.c.0.s8 %v1980
        %v1982 = vlaneseq
        %v1983 = vshrl.u32 %v1982, 7
        %v1984 = vsub.s32 %v1981, %v1983
        %v1985 = vrot.slane %v1978, %v1984
        %v1986 = vcombine.low %v1977, %v1985
        %v1987 = vcombine.high %v1977, %v1985
        %v1989 = vunpack.c.l.s4 1934713408
        %v1990 = vunpack.c.0.s8 %v1989
        %v1991 = vlaneseq
        %v1992 = vshrl.u32 %v1991, 7
        %v1993 = vsub.s32 %v1990, %v1992
        %v1994 = vrot.slane %v1986, %v1993
        %v1996 = vunpack.c.l.s4 1934713408
        %v1997 = vunpack.c.0.s8 %v1996
        %v1998 = vlaneseq
        %v1999 = vshrl.u32 %v1998, 7
        %v2000 = vsub.s32 %v1997, %v1999
        %v2001 = vrot.slane %v1987, %v2000
        %v2002 = vcombine.high %v1994, 0
        %v2003 = vcombine.high %v2001, 0
        %v2004 = vcombine.low %v1927, %v1943
        %v2006 = vunpack.c.l.s4 1983009808
        %v2007 = vunpack.c.0.s8 %v2006
        %v2008 = vlaneseq
        %v2009 = vshrl.u32 %v2008, 7
        %v2010 = vsub.s32 %v2007, %v2009
        %v2011 = vrot.slane %v2004, %v2010
        %v2012 = vcombine.low %v1935, %v1951
        %v2014 = vunpack.c.l.s4 1983009808
        %v2015 = vunpack.c.0.s8 %v2014
        %v2016 = vlaneseq
        %v2017 = vshrl.u32 %v2016, 7
        %v2018 = vsub.s32 %v2015, %v2017
        %v2019 = vrot.slane %v2012, %v2018
        %v2020 = vcombine.low %v2011, %v2019
        %v2021 = vcombine.high %v2011, %v2019
        %v2023 = vunpack.c.l.s4 1934713408
        %v2024 = vunpack.c.0.s8 %v2023
        %v2025 = vlaneseq
        %v2026 = vshrl.u32 %v2025, 7
        %v2027 = vsub.s32 %v2024, %v2026
        %v2028 = vrot.slane %v2020, %v2027
        %v2030 = vunpack.c.l.s4 1934713408
        %v2031 = vunpack.c.0.s8 %v2030
        %v2032 = vlaneseq
        %v2033 = vshrl.u32 %v2032, 7
        %v2034 = vsub.s32 %v2031, %v2033
        %v2035 = vrot.slane %v2021, %v2034
        %v2036 = vcombine.high %v2028, 0
        %v2037 = vcombine.high %v2035, 0
        %v2038 = vcombine.low %v1925, %v1941
        %v2040 = vunpack.c.l.s4 1983009808
        %v2041 = vunpack.c.0.s8 %v2040
        %v2042 = vlaneseq
        %v2043 = vshrl.u32 %v2042, 7
        %v2044 = vsub.s32 %v2041, %v2043
        %v2045 = vrot.slane %v2038, %v2044
        %v2046 = vcombine.low %v1933, %v1949
        %v2048 = vunpack.c.l.s4 1983009808
        %v2049 = vunpack.c.0.s8 %v2048
        %v2050 = vlaneseq
        %v2051 = vshrl.u32 %v2050, 7
        %v2052 = vsub.s32 %v2049, %v2051
        %v2053 = vrot.slane %v2046, %v2052
        %v2054 = vcombine.low %v2045, %v2053
        %v2055 = vcombine.high %v2045, %v2053
        %v2057 = vunpack.c.l.s4 1934713408
        %v2058 = vunpack.c.0.s8 %v2057
        %v2059 = vlaneseq
        %v2060 = vshrl.u32 %v2059, 7
        %v2061 = vsub.s32 %v2058, %v2060
        %v2062 = vrot.slane %v2054, %v2061
        %v2064 = vunpack.c.l.s4 1934713408
        %v2065 = vunpack.c.0.s8 %v2064
        %v2066 = vlaneseq
        %v2067 = vshrl.u32 %v2066, 7
        %v2068 = vsub.s32 %v2065, %v2067
        %v2069 = vrot.slane %v2055, %v2068
        %v2070 = vcombine.high %v2062, 0
        %v2071 = vcombine.high %v2069, 0
        %v2072 = vcombine.low %v1929, %v1945
        %v2074 = vunpack.c.l.s4 1983009808
        %v2075 = vunpack.c.0.s8 %v2074
        %v2076 = vlaneseq
        %v2077 = vshrl.u32 %v2076, 7
        %v2078 = vsub.s32 %v2075, %v2077
        %v2079 = vrot.slane %v2072, %v2078
        %v2080 = vcombine.low %v1937, %v1953
        %v2082 = vunpack.c.l.s4 1983009808
        %v2083 = vunpack.c.0.s8 %v2082
        %v2084 = vlaneseq
        %v2085 = vshrl.u32 %v2084, 7
        %v2086 = vsub.s32 %v2083, %v2085
        %v2087 = vrot.slane %v2080, %v2086
        %v2088 = vcombine.low %v2079, %v2087
        %v2089 = vcombine.high %v2079, %v2087
        %v2091 = vunpack.c.l.s4 1934713408
        %v2092 = vunpack.c.0.s8 %v2091
        %v2093 = vlaneseq
        %v2094 = vshrl.u32 %v2093, 7
        %v2095 = vsub.s32 %v2092, %v2094
        %v2096 = vrot.slane %v2088, %v2095
        %v2098 = vunpack.c.l.s4 1934713408
        %v2099 = vunpack.c.0.s8 %v2098
        %v2100 = vlaneseq
        %v2101 = vshrl.u32 %v2100, 7
        %v2102 = vsub.s32 %v2099, %v2101
        %v2103 = vrot.slane %v2089, %v2102
        %v2104 = vcombine.high %v2096, 0
        %v2105 = vcombine.high %v2103, 0
        %v2108 = vpack.i.b16 %v2028, %v1994
        %v2109 = vshrl.u32 %v1994, 16
        %v2110 = vshrl.u32 %v2028, 16
        %v2111 = vpack.i.b16 %v2110, %v2109
        %v2114 = vpack.i.b16 %v2036, %v2002
        %v2115 = vshrl.u32 %v2002, 16
        %v2116 = vshrl.u32 %v2036, 16
        %v2117 = vpack.i.b16 %v2116, %v2115
        %v2120 = vpack.i.b16 %v2035, %v2001
        %v2121 = vshrl.u32 %v2001, 16
        %v2122 = vshrl.u32 %v2035, 16
        %v2123 = vpack.i.b16 %v2122, %v2121
        %v2126 = vpack.i.b16 %v2037, %v2003
        %v2127 = vshrl.u32 %v2003, 16
        %v2128 = vshrl.u32 %v2037, 16
        %v2129 = vpack.i.b16 %v2128, %v2127
        %v2132 = vpack.i.b16 %v2096, %v2062
        %v2133 = vshrl.u32 %v2062, 16
        %v2134 = vshrl.u32 %v2096, 16
        %v2135 = vpack.i.b16 %v2134, %v2133
        %v2138 = vpack.i.b16 %v2104, %v2070
        %v2139 = vshrl.u32 %v2070, 16
        %v2140 = vshrl.u32 %v2104, 16
        %v2141 = vpack.i.b16 %v2140, %v2139
        %v2144 = vpack.i.b16 %v2103, %v2069
        %v2145 = vshrl.u32 %v2069, 16
        %v2146 = vshrl.u32 %v2103, 16
        %v2147 = vpack.i.b16 %v2146, %v2145
        %v2150 = vpack.i.b16 %v2105, %v2071
        %v2151 = vshrl.u32 %v2071, 16
        %v2152 = vshrl.u32 %v2105, 16
        %v2153 = vpack.i.b16 %v2152, %v2151
        %v2154 = vunpack.c.l.b16 %v2111
        %v2155 = vpack.c.b16 %v2154, %v2154
        %2156 = vrot.lane.b32.xlu0 %v2155, 16
        %v2157 = vpop.permute.xlu0 %2156
        %v2158 = vunpack.c.l.b16 %v2114
        %v2159 = vpack.c.b16 %v2158, %v2158
        %2160 = vrot.lane.b32.xlu0 %v2159, 32
        %v2161 = vpop.permute.xlu0 %2160
        %v2162 = vunpack.c.l.b16 %v2117
        %v2163 = vpack.c.b16 %v2162, %v2162
        %2164 = vrot.lane.b32.xlu0 %v2163, 48
        %v2165 = vpop.permute.xlu0 %2164
        %v2166 = vunpack.c.l.b16 %v2120
        %v2167 = vpack.c.b16 %v2166, %v2166
        %2168 = vrot.lane.b32.xlu0 %v2167, 64
        %v2169 = vpop.permute.xlu0 %2168
        %v2170 = vunpack.c.l.b16 %v2123
        %v2171 = vpack.c.b16 %v2170, %v2170
        %2172 = vrot.lane.b32.xlu0 %v2171, 80
        %v2173 = vpop.permute.xlu0 %2172
        %v2174 = vunpack.c.l.b16 %v2126
        %v2175 = vpack.c.b16 %v2174, %v2174
        %2176 = vrot.lane.b32.xlu0 %v2175, 96
        %v2177 = vpop.permute.xlu0 %2176
        %v2178 = vunpack.c.l.b16 %v2129
        %v2179 = vpack.c.b16 %v2178, %v2178
        %2180 = vrot.lane.b32.xlu0 %v2179, 112
        %v2181 = vpop.permute.xlu0 %2180
        %v2182 = vunpack.c.l.b16 %v2135
        %v2183 = vpack.c.b16 %v2182, %v2182
        %2184 = vrot.lane.b32.xlu0 %v2183, 16
        %v2185 = vpop.permute.xlu0 %2184
        %v2186 = vunpack.c.l.b16 %v2138
        %v2187 = vpack.c.b16 %v2186, %v2186
        %2188 = vrot.lane.b32.xlu0 %v2187, 32
        %v2189 = vpop.permute.xlu0 %2188
        %v2190 = vunpack.c.l.b16 %v2141
        %v2191 = vpack.c.b16 %v2190, %v2190
        %2192 = vrot.lane.b32.xlu0 %v2191, 48
        %v2193 = vpop.permute.xlu0 %2192
        %v2194 = vunpack.c.l.b16 %v2144
        %v2195 = vpack.c.b16 %v2194, %v2194
        %2196 = vrot.lane.b32.xlu0 %v2195, 64
        %v2197 = vpop.permute.xlu0 %2196
        %v2198 = vunpack.c.l.b16 %v2147
        %v2199 = vpack.c.b16 %v2198, %v2198
        %2200 = vrot.lane.b32.xlu0 %v2199, 80
        %v2201 = vpop.permute.xlu0 %2200
        %v2202 = vunpack.c.l.b16 %v2150
        %v2203 = vpack.c.b16 %v2202, %v2202
        %2204 = vrot.lane.b32.xlu0 %v2203, 96
        %v2205 = vpop.permute.xlu0 %2204
        %v2206 = vunpack.c.l.b16 %v2153
        %v2207 = vpack.c.b16 %v2206, %v2206
        %2208 = vrot.lane.b32.xlu0 %v2207, 112
        %v2209 = vpop.permute.xlu0 %2208
        %v2212 = vsel %vm426, %v2108, %v2157
        %v2214 = vsel %vm430, %v2212, %v2161
        %v2216 = vsel %vm433, %v2214, %v2165
        %v2218 = vsel %vm436, %v2216, %v2169
        %v2220 = vsel %vm439, %v2218, %v2173
        %v2222 = vsel %vm442, %v2220, %v2177
        %v2224 = vsel %vm445, %v2222, %v2181
        %v2227 = vsel %vm426, %v2132, %v2185
        %v2229 = vsel %vm430, %v2227, %v2189
        %v2231 = vsel %vm433, %v2229, %v2193
        %v2233 = vsel %vm436, %v2231, %v2197
        %v2235 = vsel %vm439, %v2233, %v2201
        %v2237 = vsel %vm442, %v2235, %v2205
        %v2239 = vsel %vm445, %v2237, %v2209
        %v2240 = vld [vmem:[%s168] sm:$0xe]
        %v2241 = vld [vmem:[%s168 + $0xc] sm:$0xe]
        %v2242 = vld [vmem:[%s168 + $0x18] sm:$0xe]
        %v2243 = vld [vmem:[%s168 + $0x24] sm:$0xe]
        %v2244 = vld [vmem:[%s168 + $0x30] sm:$0xe]
        %v2245 = vld [vmem:[%s168 + $0x3c] sm:$0xe]
        %v2246 = vld [vmem:[%s168 + $0x48] sm:$0xe]
        %v2247 = vld [vmem:[%s168 + $0x54] sm:$0xe]
        %vm2264 = vcmask 1042432
        %vm2265 = vcmask 1046532
        %vm2266 = vmor %vm2264, %vm2265
        %v2267 = vrot.slane %v2240, 5
        %v2268 = vrot.slane %v2267, 4
        %v2269 = vrot.slane %v171, 5
        %v2270 = vsel %vm2266, %v2268, %v2269
        %v2271 = vrot.slane %v2269, 4
        %v2272 = vrot.slane %v1115, 5
        %v2273 = vsel %vm2266, %v2271, %v2272
        %v2274 = vrot.slane %v2241, 5
        %v2275 = vrot.slane %v2274, 4
        %v2276 = vrot.slane %v173, 5
        %v2277 = vsel %vm2266, %v2275, %v2276
        %v2278 = vrot.slane %v2276, 4
        %v2279 = vrot.slane %v1116, 5
        %v2280 = vsel %vm2266, %v2278, %v2279
        %v2281 = vrot.slane %v2242, 5
        %v2282 = vrot.slane %v2281, 4
        %v2283 = vrot.slane %v175, 5
        %v2284 = vsel %vm2266, %v2282, %v2283
        %v2285 = vrot.slane %v2283, 4
        %v2286 = vrot.slane %v1117, 5
        %v2287 = vsel %vm2266, %v2285, %v2286
        %v2288 = vrot.slane %v2243, 5
        %v2289 = vrot.slane %v2288, 4
        %v2290 = vrot.slane %v177, 5
        %v2291 = vsel %vm2266, %v2289, %v2290
        %v2292 = vrot.slane %v2290, 4
        %v2293 = vrot.slane %v1118, 5
        %v2294 = vsel %vm2266, %v2292, %v2293
        %v2295 = vrot.slane %v2244, 5
        %v2296 = vrot.slane %v2295, 4
        %v2297 = vrot.slane %v179, 5
        %v2298 = vsel %vm2266, %v2296, %v2297
        %v2299 = vrot.slane %v2297, 4
        %v2300 = vrot.slane %v1119, 5
        %v2301 = vsel %vm2266, %v2299, %v2300
        %v2302 = vrot.slane %v2245, 5
        %v2303 = vrot.slane %v2302, 4
        %v2304 = vrot.slane %v181, 5
        %v2305 = vsel %vm2266, %v2303, %v2304
        %v2306 = vrot.slane %v2304, 4
        %v2307 = vrot.slane %v1120, 5
        %v2308 = vsel %vm2266, %v2306, %v2307
        %v2309 = vrot.slane %v2246, 5
        %v2310 = vrot.slane %v2309, 4
        %v2311 = vrot.slane %v183, 5
        %v2312 = vsel %vm2266, %v2310, %v2311
        %v2313 = vrot.slane %v2311, 4
        %v2314 = vrot.slane %v1121, 5
        %v2315 = vsel %vm2266, %v2313, %v2314
        %v2316 = vrot.slane %v2247, 5
        %v2317 = vrot.slane %v2316, 4
        %v2318 = vrot.slane %v185, 5
        %v2319 = vsel %vm2266, %v2317, %v2318
        %v2320 = vrot.slane %v2318, 4
        %v2321 = vrot.slane %v1122, 5
        %v2322 = vsel %vm2266, %v2320, %v2321
        %v2339 = vcombine.low %v2270, %v2298
        %v2341 = vunpack.c.l.s4 1983009808
        %v2342 = vunpack.c.0.s8 %v2341
        %v2343 = vlaneseq
        %v2344 = vshrl.u32 %v2343, 7
        %v2345 = vsub.s32 %v2342, %v2344
        %v2346 = vrot.slane %v2339, %v2345
        %v2347 = vcombine.low %v2284, %v2312
        %v2349 = vunpack.c.l.s4 1983009808
        %v2350 = vunpack.c.0.s8 %v2349
        %v2351 = vlaneseq
        %v2352 = vshrl.u32 %v2351, 7
        %v2353 = vsub.s32 %v2350, %v2352
        %v2354 = vrot.slane %v2347, %v2353
        %v2355 = vcombine.low %v2346, %v2354
        %v2356 = vcombine.high %v2346, %v2354
        %v2358 = vunpack.c.l.s4 1934713408
        %v2359 = vunpack.c.0.s8 %v2358
        %v2360 = vlaneseq
        %v2361 = vshrl.u32 %v2360, 7
        %v2362 = vsub.s32 %v2359, %v2361
        %v2363 = vrot.slane %v2355, %v2362
        %v2365 = vunpack.c.l.s4 1934713408
        %v2366 = vunpack.c.0.s8 %v2365
        %v2367 = vlaneseq
        %v2368 = vshrl.u32 %v2367, 7
        %v2369 = vsub.s32 %v2366, %v2368
        %v2370 = vrot.slane %v2356, %v2369
        %v2371 = vcombine.high %v2363, 0
        %v2372 = vcombine.high %v2370, 0
        %v2373 = vcombine.low %v2277, %v2305
        %v2375 = vunpack.c.l.s4 1983009808
        %v2376 = vunpack.c.0.s8 %v2375
        %v2377 = vlaneseq
        %v2378 = vshrl.u32 %v2377, 7
        %v2379 = vsub.s32 %v2376, %v2378
        %v2380 = vrot.slane %v2373, %v2379
        %v2381 = vcombine.low %v2291, %v2319
        %v2383 = vunpack.c.l.s4 1983009808
        %v2384 = vunpack.c.0.s8 %v2383
        %v2385 = vlaneseq
        %v2386 = vshrl.u32 %v2385, 7
        %v2387 = vsub.s32 %v2384, %v2386
        %v2388 = vrot.slane %v2381, %v2387
        %v2389 = vcombine.low %v2380, %v2388
        %v2390 = vcombine.high %v2380, %v2388
        %v2392 = vunpack.c.l.s4 1934713408
        %v2393 = vunpack.c.0.s8 %v2392
        %v2394 = vlaneseq
        %v2395 = vshrl.u32 %v2394, 7
        %v2396 = vsub.s32 %v2393, %v2395
        %v2397 = vrot.slane %v2389, %v2396
        %v2399 = vunpack.c.l.s4 1934713408
        %v2400 = vunpack.c.0.s8 %v2399
        %v2401 = vlaneseq
        %v2402 = vshrl.u32 %v2401, 7
        %v2403 = vsub.s32 %v2400, %v2402
        %v2404 = vrot.slane %v2390, %v2403
        %v2405 = vcombine.high %v2397, 0
        %v2406 = vcombine.high %v2404, 0
        %v2407 = vcombine.low %v2273, %v2301
        %v2409 = vunpack.c.l.s4 1983009808
        %v2410 = vunpack.c.0.s8 %v2409
        %v2411 = vlaneseq
        %v2412 = vshrl.u32 %v2411, 7
        %v2413 = vsub.s32 %v2410, %v2412
        %v2414 = vrot.slane %v2407, %v2413
        %v2415 = vcombine.low %v2287, %v2315
        %v2417 = vunpack.c.l.s4 1983009808
        %v2418 = vunpack.c.0.s8 %v2417
        %v2419 = vlaneseq
        %v2420 = vshrl.u32 %v2419, 7
        %v2421 = vsub.s32 %v2418, %v2420
        %v2422 = vrot.slane %v2415, %v2421
        %v2423 = vcombine.low %v2414, %v2422
        %v2424 = vcombine.high %v2414, %v2422
        %v2426 = vunpack.c.l.s4 1934713408
        %v2427 = vunpack.c.0.s8 %v2426
        %v2428 = vlaneseq
        %v2429 = vshrl.u32 %v2428, 7
        %v2430 = vsub.s32 %v2427, %v2429
        %v2431 = vrot.slane %v2423, %v2430
        %v2433 = vunpack.c.l.s4 1934713408
        %v2434 = vunpack.c.0.s8 %v2433
        %v2435 = vlaneseq
        %v2436 = vshrl.u32 %v2435, 7
        %v2437 = vsub.s32 %v2434, %v2436
        %v2438 = vrot.slane %v2424, %v2437
        %v2439 = vcombine.high %v2431, 0
        %v2440 = vcombine.high %v2438, 0
        %v2441 = vcombine.low %v2280, %v2308
        %v2443 = vunpack.c.l.s4 1983009808
        %v2444 = vunpack.c.0.s8 %v2443
        %v2445 = vlaneseq
        %v2446 = vshrl.u32 %v2445, 7
        %v2447 = vsub.s32 %v2444, %v2446
        %v2448 = vrot.slane %v2441, %v2447
        %v2449 = vcombine.low %v2294, %v2322
        %v2451 = vunpack.c.l.s4 1983009808
        %v2452 = vunpack.c.0.s8 %v2451
        %v2453 = vlaneseq
        %v2454 = vshrl.u32 %v2453, 7
        %v2455 = vsub.s32 %v2452, %v2454
        %v2456 = vrot.slane %v2449, %v2455
        %v2457 = vcombine.low %v2448, %v2456
        %v2458 = vcombine.high %v2448, %v2456
        %v2460 = vunpack.c.l.s4 1934713408
        %v2461 = vunpack.c.0.s8 %v2460
        %v2462 = vlaneseq
        %v2463 = vshrl.u32 %v2462, 7
        %v2464 = vsub.s32 %v2461, %v2463
        %v2465 = vrot.slane %v2457, %v2464
        %v2467 = vunpack.c.l.s4 1934713408
        %v2468 = vunpack.c.0.s8 %v2467
        %v2469 = vlaneseq
        %v2470 = vshrl.u32 %v2469, 7
        %v2471 = vsub.s32 %v2468, %v2470
        %v2472 = vrot.slane %v2458, %v2471
        %v2473 = vcombine.high %v2465, 0
        %v2474 = vcombine.high %v2472, 0
        %v2477 = vpack.i.b16 %v2397, %v2363
        %v2478 = vshrl.u32 %v2363, 16
        %v2479 = vshrl.u32 %v2397, 16
        %v2480 = vpack.i.b16 %v2479, %v2478
        %v2483 = vpack.i.b16 %v2405, %v2371
        %v2484 = vshrl.u32 %v2371, 16
        %v2485 = vshrl.u32 %v2405, 16
        %v2486 = vpack.i.b16 %v2485, %v2484
        %v2489 = vpack.i.b16 %v2404, %v2370
        %v2490 = vshrl.u32 %v2370, 16
        %v2491 = vshrl.u32 %v2404, 16
        %v2492 = vpack.i.b16 %v2491, %v2490
        %v2495 = vpack.i.b16 %v2406, %v2372
        %v2496 = vshrl.u32 %v2372, 16
        %v2497 = vshrl.u32 %v2406, 16
        %v2498 = vpack.i.b16 %v2497, %v2496
        %v2501 = vpack.i.b16 %v2465, %v2431
        %v2502 = vshrl.u32 %v2431, 16
        %v2503 = vshrl.u32 %v2465, 16
        %v2504 = vpack.i.b16 %v2503, %v2502
        %v2507 = vpack.i.b16 %v2473, %v2439
        %v2508 = vshrl.u32 %v2439, 16
        %v2509 = vshrl.u32 %v2473, 16
        %v2510 = vpack.i.b16 %v2509, %v2508
        %v2513 = vpack.i.b16 %v2472, %v2438
        %v2514 = vshrl.u32 %v2438, 16
        %v2515 = vshrl.u32 %v2472, 16
        %v2516 = vpack.i.b16 %v2515, %v2514
        %v2519 = vpack.i.b16 %v2474, %v2440
        %v2520 = vshrl.u32 %v2440, 16
        %v2521 = vshrl.u32 %v2474, 16
        %v2522 = vpack.i.b16 %v2521, %v2520
        %v2523 = vunpack.c.l.b16 %v2480
        %v2524 = vpack.c.b16 %v2523, %v2523
        %2525 = vrot.lane.b32.xlu0 %v2524, 16
        %v2526 = vpop.permute.xlu0 %2525
        %v2527 = vunpack.c.l.b16 %v2483
        %v2528 = vpack.c.b16 %v2527, %v2527
        %2529 = vrot.lane.b32.xlu0 %v2528, 32
        %v2530 = vpop.permute.xlu0 %2529
        %v2531 = vunpack.c.l.b16 %v2486
        %v2532 = vpack.c.b16 %v2531, %v2531
        %2533 = vrot.lane.b32.xlu0 %v2532, 48
        %v2534 = vpop.permute.xlu0 %2533
        %v2535 = vunpack.c.l.b16 %v2489
        %v2536 = vpack.c.b16 %v2535, %v2535
        %2537 = vrot.lane.b32.xlu0 %v2536, 64
        %v2538 = vpop.permute.xlu0 %2537
        %v2539 = vunpack.c.l.b16 %v2492
        %v2540 = vpack.c.b16 %v2539, %v2539
        %2541 = vrot.lane.b32.xlu0 %v2540, 80
        %v2542 = vpop.permute.xlu0 %2541
        %v2543 = vunpack.c.l.b16 %v2495
        %v2544 = vpack.c.b16 %v2543, %v2543
        %2545 = vrot.lane.b32.xlu0 %v2544, 96
        %v2546 = vpop.permute.xlu0 %2545
        %v2547 = vunpack.c.l.b16 %v2498
        %v2548 = vpack.c.b16 %v2547, %v2547
        %2549 = vrot.lane.b32.xlu0 %v2548, 112
        %v2550 = vpop.permute.xlu0 %2549
        %v2551 = vunpack.c.l.b16 %v2504
        %v2552 = vpack.c.b16 %v2551, %v2551
        %2553 = vrot.lane.b32.xlu0 %v2552, 16
        %v2554 = vpop.permute.xlu0 %2553
        %v2555 = vunpack.c.l.b16 %v2507
        %v2556 = vpack.c.b16 %v2555, %v2555
        %2557 = vrot.lane.b32.xlu0 %v2556, 32
        %v2558 = vpop.permute.xlu0 %2557
        %v2559 = vunpack.c.l.b16 %v2510
        %v2560 = vpack.c.b16 %v2559, %v2559
        %2561 = vrot.lane.b32.xlu0 %v2560, 48
        %v2562 = vpop.permute.xlu0 %2561
        %v2563 = vunpack.c.l.b16 %v2513
        %v2564 = vpack.c.b16 %v2563, %v2563
        %2565 = vrot.lane.b32.xlu0 %v2564, 64
        %v2566 = vpop.permute.xlu0 %2565
        %v2567 = vunpack.c.l.b16 %v2516
        %v2568 = vpack.c.b16 %v2567, %v2567
        %2569 = vrot.lane.b32.xlu0 %v2568, 80
        %v2570 = vpop.permute.xlu0 %2569
        %v2571 = vunpack.c.l.b16 %v2519
        %v2572 = vpack.c.b16 %v2571, %v2571
        %2573 = vrot.lane.b32.xlu0 %v2572, 96
        %v2574 = vpop.permute.xlu0 %2573
        %v2575 = vunpack.c.l.b16 %v2522
        %v2576 = vpack.c.b16 %v2575, %v2575
        %2577 = vrot.lane.b32.xlu0 %v2576, 112
        %v2578 = vpop.permute.xlu0 %2577
        %v2581 = vsel %vm426, %v2477, %v2526
        %v2583 = vsel %vm430, %v2581, %v2530
        %v2585 = vsel %vm433, %v2583, %v2534
        %v2587 = vsel %vm436, %v2585, %v2538
        %v2589 = vsel %vm439, %v2587, %v2542
        %v2591 = vsel %vm442, %v2589, %v2546
        %v2593 = vsel %vm445, %v2591, %v2550
        %v2596 = vsel %vm426, %v2501, %v2554
        %v2598 = vsel %vm430, %v2596, %v2558
        %v2600 = vsel %vm433, %v2598, %v2562
        %v2602 = vsel %vm436, %v2600, %v2566
        %v2604 = vsel %vm439, %v2602, %v2570
        %v2606 = vsel %vm442, %v2604, %v2574
        %v2608 = vsel %vm445, %v2606, %v2578
        %2609 = vrot.lane.b32.xlu0 %v2270, 127
        %v2610 = vpop.permute.xlu0 %2609
        %2611 = vrot.lane.b32.xlu0 %v2273, 127
        %v2612 = vpop.permute.xlu0 %2611
        %2613 = vrot.lane.b32.xlu0 %v2277, 127
        %v2614 = vpop.permute.xlu0 %2613
        %2615 = vrot.lane.b32.xlu0 %v2280, 127
        %v2616 = vpop.permute.xlu0 %2615
        %2617 = vrot.lane.b32.xlu0 %v2284, 127
        %v2618 = vpop.permute.xlu0 %2617
        %2619 = vrot.lane.b32.xlu0 %v2287, 127
        %v2620 = vpop.permute.xlu0 %2619
        %2621 = vrot.lane.b32.xlu0 %v2291, 127
        %v2622 = vpop.permute.xlu0 %2621
        %2623 = vrot.lane.b32.xlu0 %v2294, 127
        %v2624 = vpop.permute.xlu0 %2623
        %2625 = vrot.lane.b32.xlu0 %v2298, 127
        %v2626 = vpop.permute.xlu0 %2625
        %2627 = vrot.lane.b32.xlu0 %v2301, 127
        %v2628 = vpop.permute.xlu0 %2627
        %2629 = vrot.lane.b32.xlu0 %v2305, 127
        %v2630 = vpop.permute.xlu0 %2629
        %2631 = vrot.lane.b32.xlu0 %v2308, 127
        %v2632 = vpop.permute.xlu0 %2631
        %2633 = vrot.lane.b32.xlu0 %v2312, 127
        %v2634 = vpop.permute.xlu0 %2633
        %2635 = vrot.lane.b32.xlu0 %v2315, 127
        %v2636 = vpop.permute.xlu0 %2635
        %2637 = vrot.lane.b32.xlu0 %v2319, 127
        %v2638 = vpop.permute.xlu0 %2637
        %2639 = vrot.lane.b32.xlu0 %v2322, 127
        %v2640 = vpop.permute.xlu0 %2639
        %v2657 = vcombine.low %v2610, %v2626
        %v2659 = vunpack.c.l.s4 1983009808
        %v2660 = vunpack.c.0.s8 %v2659
        %v2661 = vlaneseq
        %v2662 = vshrl.u32 %v2661, 7
        %v2663 = vsub.s32 %v2660, %v2662
        %v2664 = vrot.slane %v2657, %v2663
        %v2665 = vcombine.low %v2618, %v2634
        %v2667 = vunpack.c.l.s4 1983009808
        %v2668 = vunpack.c.0.s8 %v2667
        %v2669 = vlaneseq
        %v2670 = vshrl.u32 %v2669, 7
        %v2671 = vsub.s32 %v2668, %v2670
        %v2672 = vrot.slane %v2665, %v2671
        %v2673 = vcombine.low %v2664, %v2672
        %v2674 = vcombine.high %v2664, %v2672
        %v2676 = vunpack.c.l.s4 1934713408
        %v2677 = vunpack.c.0.s8 %v2676
        %v2678 = vlaneseq
        %v2679 = vshrl.u32 %v2678, 7
        %v2680 = vsub.s32 %v2677, %v2679
        %v2681 = vrot.slane %v2673, %v2680
        %v2683 = vunpack.c.l.s4 1934713408
        %v2684 = vunpack.c.0.s8 %v2683
        %v2685 = vlaneseq
        %v2686 = vshrl.u32 %v2685, 7
        %v2687 = vsub.s32 %v2684, %v2686
        %v2688 = vrot.slane %v2674, %v2687
        %v2689 = vcombine.high %v2681, 0
        %v2690 = vcombine.high %v2688, 0
        %v2691 = vcombine.low %v2614, %v2630
        %v2693 = vunpack.c.l.s4 1983009808
        %v2694 = vunpack.c.0.s8 %v2693
        %v2695 = vlaneseq
        %v2696 = vshrl.u32 %v2695, 7
        %v2697 = vsub.s32 %v2694, %v2696
        %v2698 = vrot.slane %v2691, %v2697
        %v2699 = vcombine.low %v2622, %v2638
        %v2701 = vunpack.c.l.s4 1983009808
        %v2702 = vunpack.c.0.s8 %v2701
        %v2703 = vlaneseq
        %v2704 = vshrl.u32 %v2703, 7
        %v2705 = vsub.s32 %v2702, %v2704
        %v2706 = vrot.slane %v2699, %v2705
        %v2707 = vcombine.low %v2698, %v2706
        %v2708 = vcombine.high %v2698, %v2706
        %v2710 = vunpack.c.l.s4 1934713408
        %v2711 = vunpack.c.0.s8 %v2710
        %v2712 = vlaneseq
        %v2713 = vshrl.u32 %v2712, 7
        %v2714 = vsub.s32 %v2711, %v2713
        %v2715 = vrot.slane %v2707, %v2714
        %v2717 = vunpack.c.l.s4 1934713408
        %v2718 = vunpack.c.0.s8 %v2717
        %v2719 = vlaneseq
        %v2720 = vshrl.u32 %v2719, 7
        %v2721 = vsub.s32 %v2718, %v2720
        %v2722 = vrot.slane %v2708, %v2721
        %v2723 = vcombine.high %v2715, 0
        %v2724 = vcombine.high %v2722, 0
        %v2725 = vcombine.low %v2612, %v2628
        %v2727 = vunpack.c.l.s4 1983009808
        %v2728 = vunpack.c.0.s8 %v2727
        %v2729 = vlaneseq
        %v2730 = vshrl.u32 %v2729, 7
        %v2731 = vsub.s32 %v2728, %v2730
        %v2732 = vrot.slane %v2725, %v2731
        %v2733 = vcombine.low %v2620, %v2636
        %v2735 = vunpack.c.l.s4 1983009808
        %v2736 = vunpack.c.0.s8 %v2735
        %v2737 = vlaneseq
        %v2738 = vshrl.u32 %v2737, 7
        %v2739 = vsub.s32 %v2736, %v2738
        %v2740 = vrot.slane %v2733, %v2739
        %v2741 = vcombine.low %v2732, %v2740
        %v2742 = vcombine.high %v2732, %v2740
        %v2744 = vunpack.c.l.s4 1934713408
        %v2745 = vunpack.c.0.s8 %v2744
        %v2746 = vlaneseq
        %v2747 = vshrl.u32 %v2746, 7
        %v2748 = vsub.s32 %v2745, %v2747
        %v2749 = vrot.slane %v2741, %v2748
        %v2751 = vunpack.c.l.s4 1934713408
        %v2752 = vunpack.c.0.s8 %v2751
        %v2753 = vlaneseq
        %v2754 = vshrl.u32 %v2753, 7
        %v2755 = vsub.s32 %v2752, %v2754
        %v2756 = vrot.slane %v2742, %v2755
        %v2757 = vcombine.high %v2749, 0
        %v2758 = vcombine.high %v2756, 0
        %v2759 = vcombine.low %v2616, %v2632
        %v2761 = vunpack.c.l.s4 1983009808
        %v2762 = vunpack.c.0.s8 %v2761
        %v2763 = vlaneseq
        %v2764 = vshrl.u32 %v2763, 7
        %v2765 = vsub.s32 %v2762, %v2764
        %v2766 = vrot.slane %v2759, %v2765
        %v2767 = vcombine.low %v2624, %v2640
        %v2769 = vunpack.c.l.s4 1983009808
        %v2770 = vunpack.c.0.s8 %v2769
        %v2771 = vlaneseq
        %v2772 = vshrl.u32 %v2771, 7
        %v2773 = vsub.s32 %v2770, %v2772
        %v2774 = vrot.slane %v2767, %v2773
        %v2775 = vcombine.low %v2766, %v2774
        %v2776 = vcombine.high %v2766, %v2774
        %v2778 = vunpack.c.l.s4 1934713408
        %v2779 = vunpack.c.0.s8 %v2778
        %v2780 = vlaneseq
        %v2781 = vshrl.u32 %v2780, 7
        %v2782 = vsub.s32 %v2779, %v2781
        %v2783 = vrot.slane %v2775, %v2782
        %v2785 = vunpack.c.l.s4 1934713408
        %v2786 = vunpack.c.0.s8 %v2785
        %v2787 = vlaneseq
        %v2788 = vshrl.u32 %v2787, 7
        %v2789 = vsub.s32 %v2786, %v2788
        %v2790 = vrot.slane %v2776, %v2789
        %v2791 = vcombine.high %v2783, 0
        %v2792 = vcombine.high %v2790, 0
        %v2795 = vpack.i.b16 %v2715, %v2681
        %v2796 = vshrl.u32 %v2681, 16
        %v2797 = vshrl.u32 %v2715, 16
        %v2798 = vpack.i.b16 %v2797, %v2796
        %v2801 = vpack.i.b16 %v2723, %v2689
        %v2802 = vshrl.u32 %v2689, 16
        %v2803 = vshrl.u32 %v2723, 16
        %v2804 = vpack.i.b16 %v2803, %v2802
        %v2807 = vpack.i.b16 %v2722, %v2688
        %v2808 = vshrl.u32 %v2688, 16
        %v2809 = vshrl.u32 %v2722, 16
        %v2810 = vpack.i.b16 %v2809, %v2808
        %v2813 = vpack.i.b16 %v2724, %v2690
        %v2814 = vshrl.u32 %v2690, 16
        %v2815 = vshrl.u32 %v2724, 16
        %v2816 = vpack.i.b16 %v2815, %v2814
        %v2819 = vpack.i.b16 %v2783, %v2749
        %v2820 = vshrl.u32 %v2749, 16
        %v2821 = vshrl.u32 %v2783, 16
        %v2822 = vpack.i.b16 %v2821, %v2820
        %v2825 = vpack.i.b16 %v2791, %v2757
        %v2826 = vshrl.u32 %v2757, 16
        %v2827 = vshrl.u32 %v2791, 16
        %v2828 = vpack.i.b16 %v2827, %v2826
        %v2831 = vpack.i.b16 %v2790, %v2756
        %v2832 = vshrl.u32 %v2756, 16
        %v2833 = vshrl.u32 %v2790, 16
        %v2834 = vpack.i.b16 %v2833, %v2832
        %v2837 = vpack.i.b16 %v2792, %v2758
        %v2838 = vshrl.u32 %v2758, 16
        %v2839 = vshrl.u32 %v2792, 16
        %v2840 = vpack.i.b16 %v2839, %v2838
        %v2841 = vunpack.c.l.b16 %v2798
        %v2842 = vpack.c.b16 %v2841, %v2841
        %2843 = vrot.lane.b32.xlu0 %v2842, 16
        %v2844 = vpop.permute.xlu0 %2843
        %v2845 = vunpack.c.l.b16 %v2801
        %v2846 = vpack.c.b16 %v2845, %v2845
        %2847 = vrot.lane.b32.xlu0 %v2846, 32
        %v2848 = vpop.permute.xlu0 %2847
        %v2849 = vunpack.c.l.b16 %v2804
        %v2850 = vpack.c.b16 %v2849, %v2849
        %2851 = vrot.lane.b32.xlu0 %v2850, 48
        %v2852 = vpop.permute.xlu0 %2851
        %v2853 = vunpack.c.l.b16 %v2807
        %v2854 = vpack.c.b16 %v2853, %v2853
        %2855 = vrot.lane.b32.xlu0 %v2854, 64
        %v2856 = vpop.permute.xlu0 %2855
        %v2857 = vunpack.c.l.b16 %v2810
        %v2858 = vpack.c.b16 %v2857, %v2857
        %2859 = vrot.lane.b32.xlu0 %v2858, 80
        %v2860 = vpop.permute.xlu0 %2859
        %v2861 = vunpack.c.l.b16 %v2813
        %v2862 = vpack.c.b16 %v2861, %v2861
        %2863 = vrot.lane.b32.xlu0 %v2862, 96
        %v2864 = vpop.permute.xlu0 %2863
        %v2865 = vunpack.c.l.b16 %v2816
        %v2866 = vpack.c.b16 %v2865, %v2865
        %2867 = vrot.lane.b32.xlu0 %v2866, 112
        %v2868 = vpop.permute.xlu0 %2867
        %v2869 = vunpack.c.l.b16 %v2822
        %v2870 = vpack.c.b16 %v2869, %v2869
        %2871 = vrot.lane.b32.xlu0 %v2870, 16
        %v2872 = vpop.permute.xlu0 %2871
        %v2873 = vunpack.c.l.b16 %v2825
        %v2874 = vpack.c.b16 %v2873, %v2873
        %2875 = vrot.lane.b32.xlu0 %v2874, 32
        %v2876 = vpop.permute.xlu0 %2875
        %v2877 = vunpack.c.l.b16 %v2828
        %v2878 = vpack.c.b16 %v2877, %v2877
        %2879 = vrot.lane.b32.xlu0 %v2878, 48
        %v2880 = vpop.permute.xlu0 %2879
        %v2881 = vunpack.c.l.b16 %v2831
        %v2882 = vpack.c.b16 %v2881, %v2881
        %2883 = vrot.lane.b32.xlu0 %v2882, 64
        %v2884 = vpop.permute.xlu0 %2883
        %v2885 = vunpack.c.l.b16 %v2834
        %v2886 = vpack.c.b16 %v2885, %v2885
        %2887 = vrot.lane.b32.xlu0 %v2886, 80
        %v2888 = vpop.permute.xlu0 %2887
        %v2889 = vunpack.c.l.b16 %v2837
        %v2890 = vpack.c.b16 %v2889, %v2889
        %2891 = vrot.lane.b32.xlu0 %v2890, 96
        %v2892 = vpop.permute.xlu0 %2891
        %v2893 = vunpack.c.l.b16 %v2840
        %v2894 = vpack.c.b16 %v2893, %v2893
        %2895 = vrot.lane.b32.xlu0 %v2894, 112
        %v2896 = vpop.permute.xlu0 %2895
        %v2899 = vsel %vm426, %v2795, %v2844
        %v2901 = vsel %vm430, %v2899, %v2848
        %v2903 = vsel %vm433, %v2901, %v2852
        %v2905 = vsel %vm436, %v2903, %v2856
        %v2907 = vsel %vm439, %v2905, %v2860
        %v2909 = vsel %vm442, %v2907, %v2864
        %v2911 = vsel %vm445, %v2909, %v2868
        %v2914 = vsel %vm426, %v2819, %v2872
        %v2916 = vsel %vm430, %v2914, %v2876
        %v2918 = vsel %vm433, %v2916, %v2880
        %v2920 = vsel %vm436, %v2918, %v2884
        %v2922 = vsel %vm439, %v2920, %v2888
        %v2924 = vsel %vm442, %v2922, %v2892
        %v2926 = vsel %vm445, %v2924, %v2896
        %2927 = vrot.lane.b32.xlu0 %v2270, 126
        %v2928 = vpop.permute.xlu0 %2927
        %2929 = vrot.lane.b32.xlu0 %v2273, 126
        %v2930 = vpop.permute.xlu0 %2929
        %2931 = vrot.lane.b32.xlu0 %v2277, 126
        %v2932 = vpop.permute.xlu0 %2931
        %2933 = vrot.lane.b32.xlu0 %v2280, 126
        %v2934 = vpop.permute.xlu0 %2933
        %2935 = vrot.lane.b32.xlu0 %v2284, 126
        %v2936 = vpop.permute.xlu0 %2935
        %2937 = vrot.lane.b32.xlu0 %v2287, 126
        %v2938 = vpop.permute.xlu0 %2937
        %2939 = vrot.lane.b32.xlu0 %v2291, 126
        %v2940 = vpop.permute.xlu0 %2939
        %2941 = vrot.lane.b32.xlu0 %v2294, 126
        %v2942 = vpop.permute.xlu0 %2941
        %2943 = vrot.lane.b32.xlu0 %v2298, 126
        %v2944 = vpop.permute.xlu0 %2943
        %2945 = vrot.lane.b32.xlu0 %v2301, 126
        %v2946 = vpop.permute.xlu0 %2945
        %2947 = vrot.lane.b32.xlu0 %v2305, 126
        %v2948 = vpop.permute.xlu0 %2947
        %2949 = vrot.lane.b32.xlu0 %v2308, 126
        %v2950 = vpop.permute.xlu0 %2949
        %2951 = vrot.lane.b32.xlu0 %v2312, 126
        %v2952 = vpop.permute.xlu0 %2951
        %2953 = vrot.lane.b32.xlu0 %v2315, 126
        %v2954 = vpop.permute.xlu0 %2953
        %2955 = vrot.lane.b32.xlu0 %v2319, 126
        %v2956 = vpop.permute.xlu0 %2955
        %2957 = vrot.lane.b32.xlu0 %v2322, 126
        %v2958 = vpop.permute.xlu0 %2957
        %v2975 = vcombine.low %v2928, %v2944
        %v2977 = vunpack.c.l.s4 1983009808
        %v2978 = vunpack.c.0.s8 %v2977
        %v2979 = vlaneseq
        %v2980 = vshrl.u32 %v2979, 7
        %v2981 = vsub.s32 %v2978, %v2980
        %v2982 = vrot.slane %v2975, %v2981
        %v2983 = vcombine.low %v2936, %v2952
        %v2985 = vunpack.c.l.s4 1983009808
        %v2986 = vunpack.c.0.s8 %v2985
        %v2987 = vlaneseq
        %v2988 = vshrl.u32 %v2987, 7
        %v2989 = vsub.s32 %v2986, %v2988
        %v2990 = vrot.slane %v2983, %v2989
        %v2991 = vcombine.low %v2982, %v2990
        %v2992 = vcombine.high %v2982, %v2990
        %v2994 = vunpack.c.l.s4 1934713408
        %v2995 = vunpack.c.0.s8 %v2994
        %v2996 = vlaneseq
        %v2997 = vshrl.u32 %v2996, 7
        %v2998 = vsub.s32 %v2995, %v2997
        %v2999 = vrot.slane %v2991, %v2998
        %v3001 = vunpack.c.l.s4 1934713408
        %v3002 = vunpack.c.0.s8 %v3001
        %v3003 = vlaneseq
        %v3004 = vshrl.u32 %v3003, 7
        %v3005 = vsub.s32 %v3002, %v3004
        %v3006 = vrot.slane %v2992, %v3005
        %v3007 = vcombine.high %v2999, 0
        %v3008 = vcombine.high %v3006, 0
        %v3009 = vcombine.low %v2932, %v2948
        %v3011 = vunpack.c.l.s4 1983009808
        %v3012 = vunpack.c.0.s8 %v3011
        %v3013 = vlaneseq
        %v3014 = vshrl.u32 %v3013, 7
        %v3015 = vsub.s32 %v3012, %v3014
        %v3016 = vrot.slane %v3009, %v3015
        %v3017 = vcombine.low %v2940, %v2956
        %v3019 = vunpack.c.l.s4 1983009808
        %v3020 = vunpack.c.0.s8 %v3019
        %v3021 = vlaneseq
        %v3022 = vshrl.u32 %v3021, 7
        %v3023 = vsub.s32 %v3020, %v3022
        %v3024 = vrot.slane %v3017, %v3023
        %v3025 = vcombine.low %v3016, %v3024
        %v3026 = vcombine.high %v3016, %v3024
        %v3028 = vunpack.c.l.s4 1934713408
        %v3029 = vunpack.c.0.s8 %v3028
        %v3030 = vlaneseq
        %v3031 = vshrl.u32 %v3030, 7
        %v3032 = vsub.s32 %v3029, %v3031
        %v3033 = vrot.slane %v3025, %v3032
        %v3035 = vunpack.c.l.s4 1934713408
        %v3036 = vunpack.c.0.s8 %v3035
        %v3037 = vlaneseq
        %v3038 = vshrl.u32 %v3037, 7
        %v3039 = vsub.s32 %v3036, %v3038
        %v3040 = vrot.slane %v3026, %v3039
        %v3041 = vcombine.high %v3033, 0
        %v3042 = vcombine.high %v3040, 0
        %v3043 = vcombine.low %v2930, %v2946
        %v3045 = vunpack.c.l.s4 1983009808
        %v3046 = vunpack.c.0.s8 %v3045
        %v3047 = vlaneseq
        %v3048 = vshrl.u32 %v3047, 7
        %v3049 = vsub.s32 %v3046, %v3048
        %v3050 = vrot.slane %v3043, %v3049
        %v3051 = vcombine.low %v2938, %v2954
        %v3053 = vunpack.c.l.s4 1983009808
        %v3054 = vunpack.c.0.s8 %v3053
        %v3055 = vlaneseq
        %v3056 = vshrl.u32 %v3055, 7
        %v3057 = vsub.s32 %v3054, %v3056
        %v3058 = vrot.slane %v3051, %v3057
        %v3059 = vcombine.low %v3050, %v3058
        %v3060 = vcombine.high %v3050, %v3058
        %v3062 = vunpack.c.l.s4 1934713408
        %v3063 = vunpack.c.0.s8 %v3062
        %v3064 = vlaneseq
        %v3065 = vshrl.u32 %v3064, 7
        %v3066 = vsub.s32 %v3063, %v3065
        %v3067 = vrot.slane %v3059, %v3066
        %v3069 = vunpack.c.l.s4 1934713408
        %v3070 = vunpack.c.0.s8 %v3069
        %v3071 = vlaneseq
        %v3072 = vshrl.u32 %v3071, 7
        %v3073 = vsub.s32 %v3070, %v3072
        %v3074 = vrot.slane %v3060, %v3073
        %v3075 = vcombine.high %v3067, 0
        %v3076 = vcombine.high %v3074, 0
        %v3077 = vcombine.low %v2934, %v2950
        %v3079 = vunpack.c.l.s4 1983009808
        %v3080 = vunpack.c.0.s8 %v3079
        %v3081 = vlaneseq
        %v3082 = vshrl.u32 %v3081, 7
        %v3083 = vsub.s32 %v3080, %v3082
        %v3084 = vrot.slane %v3077, %v3083
        %v3085 = vcombine.low %v2942, %v2958
        %v3087 = vunpack.c.l.s4 1983009808
        %v3088 = vunpack.c.0.s8 %v3087
        %v3089 = vlaneseq
        %v3090 = vshrl.u32 %v3089, 7
        %v3091 = vsub.s32 %v3088, %v3090
        %v3092 = vrot.slane %v3085, %v3091
        %v3093 = vcombine.low %v3084, %v3092
        %v3094 = vcombine.high %v3084, %v3092
        %v3096 = vunpack.c.l.s4 1934713408
        %v3097 = vunpack.c.0.s8 %v3096
        %v3098 = vlaneseq
        %v3099 = vshrl.u32 %v3098, 7
        %v3100 = vsub.s32 %v3097, %v3099
        %v3101 = vrot.slane %v3093, %v3100
        %v3103 = vunpack.c.l.s4 1934713408
        %v3104 = vunpack.c.0.s8 %v3103
        %v3105 = vlaneseq
        %v3106 = vshrl.u32 %v3105, 7
        %v3107 = vsub.s32 %v3104, %v3106
        %v3108 = vrot.slane %v3094, %v3107
        %v3109 = vcombine.high %v3101, 0
        %v3110 = vcombine.high %v3108, 0
        %v3113 = vpack.i.b16 %v3033, %v2999
        %v3114 = vshrl.u32 %v2999, 16
        %v3115 = vshrl.u32 %v3033, 16
        %v3116 = vpack.i.b16 %v3115, %v3114
        %v3119 = vpack.i.b16 %v3041, %v3007
        %v3120 = vshrl.u32 %v3007, 16
        %v3121 = vshrl.u32 %v3041, 16
        %v3122 = vpack.i.b16 %v3121, %v3120
        %v3125 = vpack.i.b16 %v3040, %v3006
        %v3126 = vshrl.u32 %v3006, 16
        %v3127 = vshrl.u32 %v3040, 16
        %v3128 = vpack.i.b16 %v3127, %v3126
        %v3131 = vpack.i.b16 %v3042, %v3008
        %v3132 = vshrl.u32 %v3008, 16
        %v3133 = vshrl.u32 %v3042, 16
        %v3134 = vpack.i.b16 %v3133, %v3132
        %v3137 = vpack.i.b16 %v3101, %v3067
        %v3138 = vshrl.u32 %v3067, 16
        %v3139 = vshrl.u32 %v3101, 16
        %v3140 = vpack.i.b16 %v3139, %v3138
        %v3143 = vpack.i.b16 %v3109, %v3075
        %v3144 = vshrl.u32 %v3075, 16
        %v3145 = vshrl.u32 %v3109, 16
        %v3146 = vpack.i.b16 %v3145, %v3144
        %v3149 = vpack.i.b16 %v3108, %v3074
        %v3150 = vshrl.u32 %v3074, 16
        %v3151 = vshrl.u32 %v3108, 16
        %v3152 = vpack.i.b16 %v3151, %v3150
        %v3155 = vpack.i.b16 %v3110, %v3076
        %v3156 = vshrl.u32 %v3076, 16
        %v3157 = vshrl.u32 %v3110, 16
        %v3158 = vpack.i.b16 %v3157, %v3156
        %v3159 = vunpack.c.l.b16 %v3116
        %v3160 = vpack.c.b16 %v3159, %v3159
        %3161 = vrot.lane.b32.xlu0 %v3160, 16
        %v3162 = vpop.permute.xlu0 %3161
        %v3163 = vunpack.c.l.b16 %v3119
        %v3164 = vpack.c.b16 %v3163, %v3163
        %3165 = vrot.lane.b32.xlu0 %v3164, 32
        %v3166 = vpop.permute.xlu0 %3165
        %v3167 = vunpack.c.l.b16 %v3122
        %v3168 = vpack.c.b16 %v3167, %v3167
        %3169 = vrot.lane.b32.xlu0 %v3168, 48
        %v3170 = vpop.permute.xlu0 %3169
        %v3171 = vunpack.c.l.b16 %v3125
        %v3172 = vpack.c.b16 %v3171, %v3171
        %3173 = vrot.lane.b32.xlu0 %v3172, 64
        %v3174 = vpop.permute.xlu0 %3173
        %v3175 = vunpack.c.l.b16 %v3128
        %v3176 = vpack.c.b16 %v3175, %v3175
        %3177 = vrot.lane.b32.xlu0 %v3176, 80
        %v3178 = vpop.permute.xlu0 %3177
        %v3179 = vunpack.c.l.b16 %v3131
        %v3180 = vpack.c.b16 %v3179, %v3179
        %3181 = vrot.lane.b32.xlu0 %v3180, 96
        %v3182 = vpop.permute.xlu0 %3181
        %v3183 = vunpack.c.l.b16 %v3134
        %v3184 = vpack.c.b16 %v3183, %v3183
        %3185 = vrot.lane.b32.xlu0 %v3184, 112
        %v3186 = vpop.permute.xlu0 %3185
        %v3187 = vunpack.c.l.b16 %v3140
        %v3188 = vpack.c.b16 %v3187, %v3187
        %3189 = vrot.lane.b32.xlu0 %v3188, 16
        %v3190 = vpop.permute.xlu0 %3189
        %v3191 = vunpack.c.l.b16 %v3143
        %v3192 = vpack.c.b16 %v3191, %v3191
        %3193 = vrot.lane.b32.xlu0 %v3192, 32
        %v3194 = vpop.permute.xlu0 %3193
        %v3195 = vunpack.c.l.b16 %v3146
        %v3196 = vpack.c.b16 %v3195, %v3195
        %3197 = vrot.lane.b32.xlu0 %v3196, 48
        %v3198 = vpop.permute.xlu0 %3197
        %v3199 = vunpack.c.l.b16 %v3149
        %v3200 = vpack.c.b16 %v3199, %v3199
        %3201 = vrot.lane.b32.xlu0 %v3200, 64
        %v3202 = vpop.permute.xlu0 %3201
        %v3203 = vunpack.c.l.b16 %v3152
        %v3204 = vpack.c.b16 %v3203, %v3203
        %3205 = vrot.lane.b32.xlu0 %v3204, 80
        %v3206 = vpop.permute.xlu0 %3205
        %v3207 = vunpack.c.l.b16 %v3155
        %v3208 = vpack.c.b16 %v3207, %v3207
        %3209 = vrot.lane.b32.xlu0 %v3208, 96
        %v3210 = vpop.permute.xlu0 %3209
        %v3211 = vunpack.c.l.b16 %v3158
        %v3212 = vpack.c.b16 %v3211, %v3211
        %3213 = vrot.lane.b32.xlu0 %v3212, 112
        %v3214 = vpop.permute.xlu0 %3213
        %v3217 = vsel %vm426, %v3113, %v3162
        %v3219 = vsel %vm430, %v3217, %v3166
        %v3221 = vsel %vm433, %v3219, %v3170
        %v3223 = vsel %vm436, %v3221, %v3174
        %v3225 = vsel %vm439, %v3223, %v3178
        %v3227 = vsel %vm442, %v3225, %v3182
        %v3229 = vsel %vm445, %v3227, %v3186
        %v3232 = vsel %vm426, %v3137, %v3190
        %v3234 = vsel %vm430, %v3232, %v3194
        %v3236 = vsel %vm433, %v3234, %v3198
        %v3238 = vsel %vm436, %v3236, %v3202
        %v3240 = vsel %vm439, %v3238, %v3206
        %v3242 = vsel %vm442, %v3240, %v3210
        %v3244 = vsel %vm445, %v3242, %v3214
        %v3247 = vrot.slane %v781, 4
        %v3248 = vrot.slane %v796, 4
        %v3251 = vrot.slane %v1588, 4
        %v3252 = vrot.slane %v1603, 4
        %v3255 = vrot.slane %v2224, 4
        %v3256 = vrot.slane %v2239, 4
        %v3259 = vrot.slane %v2911, 4
        %v3260 = vrot.slane %v2926, 4
        %vm3261 = vcmask 1043456
        %v3263 = vsel %vm3261, %v447, %v3247
        %v3266 = vsel %vm3261, %v462, %v3248
        %v3269 = vsel %vm3261, %v1099, %v3251
        %v3272 = vsel %vm3261, %v1114, %v3252
        %v3275 = vsel %vm3261, %v1906, %v3255
        %v3278 = vsel %vm3261, %v1921, %v3256
        %v3281 = vsel %vm3261, %v2593, %v3259
        %v3284 = vsel %vm3261, %v2608, %v3260
        %v3286 = vld [vmem:[%s1] sm:$0xf]
        %v3287 = vld [vmem:[%s1 + $0x4] sm:$0xf]
        %v3288 = vld [vmem:[%s2] sm:$0xff]
        %v3289 = vld [vmem:[%s2 + $0x8] sm:$0xff]
        %3291 = vset.pattern.permute.xlu0 0
        %3292 = vperm.xlu0 %3291, %v3288
        %v3293 = vpop.permute.xlu0 %3292
        %3296 = vset.pattern.permute.xlu0 0
        %3297 = vperm.xlu0 %3296, %v3289
        %v3298 = vpop.permute.xlu0 %3297
        %v3302 = vunpack.c.l.b16 %v3286
        %v3303 = vunpack.c.l.b16 %v3287
        %v3304 = vpack.c.b16 %v3303, %v3302
        %vm3305 = vcmask 588800
        %v3307 = vsel %vm3305, %v3304, 0
        %v3309 = vsel %vm3261, %v3229, 0
        %v3311 = vsel %vm3261, %v3244, 0
        %3313 = vmatprep.subr.bf16.mxu0 %v3266
        %3314 = vmatpush1.bf16.msra.mxu0 %v3263
        %3315 = vmatprep.subr.bf16.mxu0 %v3272
        %3316 = vmatpush1.bf16.msra.mxu0 %v3269
        %3317 = vmatprep.subr.bf16.mxu0 %v3278
        %3318 = vmatpush1.bf16.msra.mxu0 %v3275
        %3319 = vmatprep.subr.bf16.mxu0 %v3284
        %3320 = vmatpush1.bf16.msra.mxu0 %v3281
        %3321 = vmatprep.subr.bf16.mxu0 %v3311
        %3322 = vmatpush1.bf16.msra.mxu0 %v3309
        %3323 = vmatprep.subr.bf16.mxu0 0
        %3324 = vmatpush1.bf16.msra.mxu0 0
        %3325 = vmatprep.subr.bf16.mxu0 0
        %3326 = vmatpush1.bf16.msra.mxu0 0
        %3327 = vmatprep.subr.bf16.mxu0 0
        %3328 = vmatpush1.bf16.msra.mxu0 0
        %3329 = vmatprep.subr.bf16.mxu0 0
        %3330 = vmatpush1.bf16.msra.mxu0 0
        %3331 = vmatprep.subr.bf16.mxu0 0
        %3332 = vmatpush1.bf16.msra.mxu0 0
        %3333 = vmatprep.subr.bf16.mxu0 0
        %3334 = vmatpush1.bf16.msra.mxu0 0
        %3335 = vmatprep.subr.bf16.mxu0 0
        %3336 = vmatpush1.bf16.msra.mxu0 0
        %3337 = vmatprep.subr.bf16.mxu0 0
        %3338 = vmatpush1.bf16.msra.mxu0 0
        %3339 = vmatprep.subr.bf16.mxu0 0
        %3340 = vmatpush1.bf16.msra.mxu0 0
        %3341 = vmatprep.subr.bf16.mxu0 0
        %3342 = vmatpush1.bf16.msra.mxu0 0
        %3343 = vmatprep.subr.bf16.mxu0 0
        %3344 = vmatpush1.bf16.msra.mxu0 0
        %3345 = vmatprep.mubr.bf16.mxu0 0
        %3346 = vmatmul.mubr.bf16.gmra.mrb[0].mxu0 %v3307
        %v3347 = vpop.f32.mrb[0].mxu0
        %v3348 = vadd.f32 %v3293, %v3347
        %v3349 = vpop.f32.mrb[0].mxu0
        %v3350 = vadd.f32 %v3293, %v3349
        %v3351 = vpop.f32.mrb[0].mxu0
        %v3352 = vadd.f32 %v3298, %v3351
        %v3353 = vpop.f32.mrb[0].mxu0
        %v3354 = vadd.f32 %v3298, %v3353
        %3355 = vdwg.mxu0
        %3356 = vst [vmem:[%s163] sm:$0xff] %v3348
        %3357 = vst [vmem:[%s163 + $0x8] sm:$0xff] %v3350
        %3358 = vst [vmem:[%s163 + $0x10] sm:$0xff] %v3352
        %3359 = vst [vmem:[%s163 + $0x18] sm:$0xff] %v3354
        %s3360 = sand.u32 %s93, 1
        %s3361 = scalar_lea.sflag [#allocation3], %s3360
        %s3362 = sand.u32 %s93, 1
        %s3363 = smul.addr %s3362, 32
        %s3364 = scalar_lea.vmem [#allocation2], %s3363
        // Predicated region
        $region33: #{tpu_custom_call.1} parent=31 // pred_check
          %p3365 = pneg %p103
        $region34: #{tpu_custom_call.1} parent=31 // pred_check_branch
          %3367 = sbr.rel (%p3365) target = $region36
        $region35: #{tpu_custom_call.1} parent=31 // pred_region
          %s3369 = ssub.s32 512, 512
          %3370 = vsyncadd %s3361, %s3369
          %s3371 = smul.addr %s17, 4
          %s3372 = smul.addr %s3371, 128
          %s3373 = scalar_lea.hbm %s3, %s3372
          %s3374 = sshll.u32 %s3364, 4
          %s3375 = int_to_ptr.vmem [resolvable:$true] %s3374
          %3380 = dma.vmem_to_hbm [thread:$0]  %s3375, 512, %s3373, %s3361, 256, 256, 16
        $region36: #{tpu_custom_call.1} parent=31 // pred_fallthru
          _
      $region32: #{tpu_custom_call.1} parent=5 // pred_fallthru
        _
      %p3381 = scmp.le.s32.totalorder 2, %s12
      // Predicated region
      $region37: #{tpu_custom_call.1} parent=5 // pred_check
        %p3382 = pneg %p3381
      $region38: #{tpu_custom_call.1} parent=5 // pred_check_branch
        %3384 = sbr.rel (%p3382) target = $region40
      $region39: #{tpu_custom_call.1} parent=5 // pred_region
        %s3385 = ssub.s32 %s12, 2
        // Predicated region
        $region41: #{tpu_custom_call.1} parent=39 // pred_check
          %p3386 = pneg %p109
        $region42: #{tpu_custom_call.1} parent=39 // pred_check_branch
          %3388 = sbr.rel (%p3386) target = $region44
        $region43: #{tpu_custom_call.1} parent=39 // pred_region
          %s3389 = sand.u32 %s94, 1
          %s3390 = scalar_lea.sflag [#allocation3], %s3389
          %s3391 = sand.u32 %s94, 1
          %s3392 = smul.addr %s3391, 32
          %s3393 = scalar_lea.vmem [#allocation2], %s3392
          %3394 = dma.done %s3390, 512
        $region44: #{tpu_custom_call.1} parent=39 // pred_fallthru
          _
      $region40: #{tpu_custom_call.1} parent=5 // pred_fallthru
        _
    $region6: #{tpu_custom_call.1} parent=1 // loop_footer
      %s16 = sadd.s32 1, %s12
    $region7: #{tpu_custom_call.1} parent=1 // loop_footer_branch
      %11 = sbr.rel target = $region3
    $region8: #{tpu_custom_call.1} parent=1 // loop_exit
      _
    %3395 = vsyncpa [#allocation3], 1
    %s3396 = scalar_lea.sflag [#allocation3], 1
    %3397 = vsyncpa %s3396, 1

</llo_original>
